<compile_context>
chip_gen: v5e
topology: v5e:2x2
jax: 0.10.0
libtpu: 0.0.40
codegen_flags: <defaults>
</compile_context>

<pallas_src>
import math
from functools import partial

import jax
import jax.numpy as jnp
from jax.experimental import pallas as pl
from jax.experimental.pallas import tpu as pltpu


# --------------------------------------------------------------------------------------
# Kernel
# --------------------------------------------------------------------------------------
def _block_body(xp_ref, w_ref, b_ref, gamma_ref, beta_ref,
                scale_ref, shift_ref, o_ref, *, cg):
    # xp_ref:    (1, H+2, W+2, Cin)  padded input for one sample (compute dtype)
    # w_ref:     (9*Cin, TC)         weight-standardized conv weights, im2col layout
    # b/gamma/beta: (1, TC)          conv bias + GroupNorm affine (f32)
    # scale/shift:  (1, 1, TC)       FiLM params (f32), or None (specialized kernel)
    # o_ref:     (1, H*W, TC)        lane-dense output slab (f32)
    H = xp_ref.shape[1] - 2
    W = xp_ref.shape[2] - 2
    Cin = xp_ref.shape[3]
    TC = o_ref.shape[2]                      # channel tile; always covers whole groups

    # ---- 3x3 conv via in-kernel im2col + one big MXU matmul (K = 9*Cin) ----
    cols = []
    for dy in range(3):
        for dx in range(3):
            cols.append(xp_ref[0, dy:dy + H, dx:dx + W, :].reshape(H * W, Cin))
    patch = jnp.concatenate(cols, axis=-1)                       # (H*W, 9*Cin)
    acc = jnp.dot(patch, w_ref[...],
                  preferred_element_type=jnp.float32)            # (H*W, TC) f32 accumulate
    acc = acc + b_ref[...]

    # ---- GroupNorm (stats in f32; channel tile is group-aligned) ----
    inv_count = 1.0 / float(H * W * cg)
    s1 = jnp.sum(acc, axis=0, keepdims=True)                     # (1, TC)
    s2 = jnp.sum(acc * acc, axis=0, keepdims=True)               # (1, TC)
    if cg == 1:
        mean = s1 * inv_count
        meansq = s2 * inv_count
    else:
        # Pool-over-group + broadcast-back in one tiny matmul with an in-kernel mask
        # (no Cout^2 HBM constant; one M=2 push instead of two M=1 pushes).
        gid_r = jax.lax.broadcasted_iota(jnp.int32, (TC, 1), 0) // cg
        gid_c = jax.lax.broadcasted_iota(jnp.int32, (1, TC), 1) // cg
        gmask = jnp.where(gid_r == gid_c, inv_count, 0.0)        # (TC, TC) f32
        stats = jnp.concatenate([s1, s2], axis=0)                # (2, TC)
        pooled = jnp.dot(stats, gmask, preferred_element_type=jnp.float32)
        mean = pooled[0:1, :]
        meansq = pooled[1:2, :]
    var = meansq - mean * mean           # single-pass variance; f32 post-conv is fine here
    inv = jax.lax.rsqrt(var + 1e-5)      # torch GroupNorm default eps
    y = (acc - mean) * (inv * gamma_ref[...]) + beta_ref[...]

    # ---- optional FiLM: x * (scale + 1) + shift ----
    if scale_ref is not None:
        y = y * (scale_ref[0] + 1.0) + shift_ref[0]

    # ---- SiLU ----
    y = y * jax.nn.sigmoid(y)
    o_ref[0] = y.astype(o_ref.dtype)


def _block_kernel_ss(xp_ref, w_ref, b_ref, gamma_ref, beta_ref,
                     scale_ref, shift_ref, o_ref, *, cg):
    _block_body(xp_ref, w_ref, b_ref, gamma_ref, beta_ref,
                scale_ref, shift_ref, o_ref, cg=cg)


def _block_kernel_plain(xp_ref, w_ref, b_ref, gamma_ref, beta_ref, o_ref, *, cg):
    _block_body(xp_ref, w_ref, b_ref, gamma_ref, beta_ref,
                None, None, o_ref, cg=cg)


# --------------------------------------------------------------------------------------
# Wrapper
# --------------------------------------------------------------------------------------
def _vmem_limit_bytes():
    # Raise the default scoped-VMEM limit (16/32 MiB) but stay safely below physical.
    try:
        cap = pltpu.get_tpu_info().vmem_capacity_bytes
    except Exception:
        cap = 64 * 1024 * 1024      # conservative fallback (v7x per-core VMEM)
    return int(min(100 * 1024 * 1024, (cap * 3) // 4))


def _channel_tiling(cout, cg):
    """Pad Cout to a lane-dense multiple of 128 that keeps whole groups; pick a Cout tile."""
    lane = 128
    if cout % lane == 0:
        cpad = cout
    else:
        unit = cg * lane // math.gcd(cg, lane)
        cpad = ((cout + unit - 1) // unit) * unit
    tc = cpad
    for cand in (256, 128):          # 256 suits v6e/v7x MXU; 128 also fine (and ideal on v5e)
        if cpad % cand == 0 and cand % cg == 0:
            tc = cand
            break
    return cpad, tc


def block_forward(x_nchw, params, scale_shift=None, groups=8,
                  compute_dtype=jnp.bfloat16):
    """Pallas implementation of Block.forward. x_nchw: (N, Cin, H, W) float32 (NCHW)."""
    w, b, gamma, beta = params["w"], params["b"], params["gamma"], params["beta"]
    N, Cin, H, W = x_nchw.shape
    Cout = w.shape[0]
    assert Cout % groups == 0
    cg = Cout // groups

    # Weight standardization (parameter-space glue; eps=1e-5 for float32 inputs).
    wmean = jnp.mean(w, axis=(1, 2, 3), keepdims=True)
    wvar = jnp.var(w, axis=(1, 2, 3), keepdims=True)             # unbiased=False
    w_std = (w - wmean) * jax.lax.rsqrt(wvar + 1e-5)

    Cpad, TC = _channel_tiling(Cout, cg)
    n_ct = Cpad // TC
    pad_c = Cpad - Cout

    # (Cout,Cin,3,3) -> (3,3,Cin,Cout) -> (9*Cin, Cout) -> pad channels -> compute dtype.
    w_k = jnp.transpose(w_std, (2, 3, 1, 0)).reshape(9 * Cin, Cout)
    w_k = jnp.pad(w_k, ((0, 0), (0, pad_c))).astype(compute_dtype)

    b_p = jnp.pad(b.astype(jnp.float32), (0, pad_c)).reshape(1, Cpad)
    gamma_p = jnp.pad(gamma.astype(jnp.float32), (0, pad_c),
                      constant_values=1.0).reshape(1, Cpad)
    beta_p = jnp.pad(beta.astype(jnp.float32), (0, pad_c)).reshape(1, Cpad)

    # NCHW -> NHWC, SAME-pad spatial dims, cast conv operand to compute dtype.
    x = jnp.transpose(x_nchw, (0, 2, 3, 1)).astype(compute_dtype)
    x_pad = jnp.pad(x, ((0, 0), (1, 1), (1, 1), (0, 0)))

    operands = [x_pad, w_k, b_p, gamma_p, beta_p]
    in_specs = [
        pl.BlockSpec((1, H + 2, W + 2, Cin), lambda n, c: (n, 0, 0, 0)),
        pl.BlockSpec((9 * Cin, TC), lambda n, c: (0, c)),
        pl.BlockSpec((1, TC), lambda n, c: (0, c)),
        pl.BlockSpec((1, TC), lambda n, c: (0, c)),
        pl.BlockSpec((1, TC), lambda n, c: (0, c)),
    ]

    if scale_shift is not None:
        scale, shift = scale_shift
        scale = jnp.pad(scale.reshape(N, Cout).astype(jnp.float32),
                        ((0, 0), (0, pad_c))).reshape(N, 1, Cpad)
        shift = jnp.pad(shift.reshape(N, Cout).astype(jnp.float32),
                        ((0, 0), (0, pad_c))).reshape(N, 1, Cpad)
        operands += [scale, shift]
        in_specs += [pl.BlockSpec((1, 1, TC), lambda n, c: (n, 0, c)),
                     pl.BlockSpec((1, 1, TC), lambda n, c: (n, 0, c))]
        kernel = partial(_block_kernel_ss, cg=cg)
    else:
        kernel = partial(_block_kernel_plain, cg=cg)

    out = pl.pallas_call(
        kernel,
        out_shape=jax.ShapeDtypeStruct((N, H * W, Cpad), jnp.float32),
        grid_spec=pltpu.PrefetchScalarGridSpec(
            num_scalar_prefetch=0,
            grid=(N, n_ct),
            in_specs=in_specs,
            out_specs=pl.BlockSpec((1, H * W, TC), lambda n, c: (n, 0, c)),
        ),
        compiler_params=pltpu.CompilerParams(
            dimension_semantics=("parallel", "parallel"),
            vmem_limit_bytes=_vmem_limit_bytes(),
        ),
    )(*operands)

    out = out[:, :, :Cout].reshape(N, H, W, Cout)
    return jnp.transpose(out, (0, 3, 1, 2))       # back to NCHW


# --------------------------------------------------------------------------------------
# Pure-JAX reference (PyTorch forward semantics)
# --------------------------------------------------------------------------------------
def block_reference(x_nchw, params, scale_shift=None, groups=8):
    w, b, gamma, beta = params["w"], params["b"], params["gamma"], params["beta"]
    N, Cin, H, W = x_nchw.shape
    Cout = w.shape[0]
    wmean = jnp.mean(w, axis=(1, 2, 3), keepdims=True)
    wvar = jnp.var(w, axis=(1, 2, 3), keepdims=True)
    w_std = (w - wmean) * jax.lax.rsqrt(wvar + 1e-5)
    x = jnp.transpose(x_nchw, (0, 2, 3, 1))
    y = jax.lax.conv_general_dilated(
        x, jnp.transpose(w_std, (2, 3, 1, 0)), window_strides=(1, 1),
        padding="SAME", dimension_numbers=("NHWC", "HWIO", "NHWC"))
    y = y + b[None, None, None, :]
    cg = Cout // groups
    yg = y.reshape(N, H, W, groups, cg)
    m = jnp.mean(yg, axis=(1, 2, 4), keepdims=True)
    v = jnp.var(yg, axis=(1, 2, 4), keepdims=True)
    yg = (yg - m) * jax.lax.rsqrt(v + 1e-5)
    y = yg.reshape(N, H, W, Cout) * gamma + beta
    if scale_shift is not None:
        scale, shift = scale_shift
        y = y * (scale.reshape(N, 1, 1, Cout) + 1.0) + shift.reshape(N, 1, 1, Cout)
    y = y * jax.nn.sigmoid(y)
    return jnp.transpose(y, (0, 3, 1, 2))


def _check(name, out, ref, rtol, atol):
    assert jnp.allclose(out, ref, rtol=rtol, atol=atol), (
        f"{name}: max abs diff {float(jnp.max(jnp.abs(out - ref)))}")


# --------------------------------------------------------------------------------------
# Demo / self-test
# --------------------------------------------------------------------------------------
if __name__ == "__main__":
    key = jax.random.PRNGKey(0)
    ks = jax.random.split(key, 14)

    # --- config A: small shapes (cg == 1 path, channels padded to 128 lanes) ---
    N, Cin, Cout, H, W, groups = 2, 4, 8, 16, 16, 8
    x = jax.random.normal(ks[0], (N, Cin, H, W), jnp.float32)
    params = {
        "w": jax.random.normal(ks[1], (Cout, Cin, 3, 3), jnp.float32) * 0.2,
        "b": jax.random.normal(ks[2], (Cout,), jnp.float32) * 0.1,
        "gamma": 1.0 + 0.1 * jax.random.normal(ks[3], (Cout,), jnp.float32),
        "beta": 0.1 * jax.random.normal(ks[4], (Cout,), jnp.float32),
    }
    scale = 0.1 * jax.random.normal(ks[5], (N, Cout), jnp.float32)
    shift = 0.1 * jax.random.normal(ks[6], (N, Cout), jnp.float32)
    ss = (scale, shift)

    ref = block_reference(x, params, ss, groups)

    # exact-math check (f32 compute path), with FiLM
    out = jax.block_until_ready(
        block_forward(x, params, ss, groups, compute_dtype=jnp.float32))
    assert out.shape == (N, Cout, H, W)
    _check("A/f32/scale_shift", out, ref, 1e-3, 1e-3)

    # specialized scale_shift=None kernel
    out_none = jax.block_until_ready(
        block_forward(x, params, None, groups, compute_dtype=jnp.float32))
    _check("A/f32/no_scale_shift", out_none,
           block_reference(x, params, None, groups), 1e-3, 1e-3)

    # default fast path: bf16 conv operands, f32 stats/epilogue
    out_bf16 = jax.block_until_ready(block_forward(x, params, ss, groups))
    _check("A/bf16/scale_shift", out_bf16, ref, 5e-2, 5e-2)

    # --- config B: wide channels (cg > 1 group pooling, two Cout tiles) ---
    N2, Cin2, Cout2, H2, W2, groups2 = 1, 8, 512, 8, 8, 8
    x2 = jax.random.normal(ks[7], (N2, Cin2, H2, W2), jnp.float32)
    params2 = {
        "w": jax.random.normal(ks[8], (Cout2, Cin2, 3, 3), jnp.float32) * 0.2,
        "b": jax.random.normal(ks[9], (Cout2,), jnp.float32) * 0.1,
        "gamma": 1.0 + 0.1 * jax.random.normal(ks[10], (Cout2,), jnp.float32),
        "beta": 0.1 * jax.random.normal(ks[11], (Cout2,), jnp.float32),
    }
    ss2 = (0.1 * jax.random.normal(ks[12], (N2, Cout2), jnp.float32),
           0.1 * jax.random.normal(ks[13], (N2, Cout2), jnp.float32))
    out2 = jax.block_until_ready(
        block_forward(x2, params2, ss2, groups2, compute_dtype=jnp.float32))
    _check("B/f32/scale_shift", out2,
           block_reference(x2, params2, ss2, groups2), 1e-3, 1e-3)

    print("KERNEL_OK")
</pallas_src>

<mosaic_0001>
module attributes {stable_mosaic.version = 11 : i64} {
  func.func @_block_kernel_ss(%arg0: i32, %arg1: i32, %arg2: memref<1x18x18x4xf32, #tpu.memory_space<vmem>>, %arg3: memref<36x128xf32, #tpu.memory_space<vmem>>, %arg4: memref<1x128xf32, #tpu.memory_space<vmem>>, %arg5: memref<1x128xf32, #tpu.memory_space<vmem>>, %arg6: memref<1x128xf32, #tpu.memory_space<vmem>>, %arg7: memref<1x1x128xf32, #tpu.memory_space<vmem>>, %arg8: memref<1x1x128xf32, #tpu.memory_space<vmem>>, %arg9: memref<1x256x128xf32, #tpu.memory_space<vmem>>) attributes {dimension_semantics = [#tpu.dimension_semantics<parallel>, #tpu.dimension_semantics<parallel>], iteration_bounds = array<i64: 2, 1>, scalar_prefetch = 0 : i64, scratch_operands = 0 : i64, tpu.core_type = #tpu.core_type<tc>, window_params = [{transform_indices = @transform_0, window_bounds = array<i64: 1, 18, 18, 4>}, {transform_indices = @transform_1, window_bounds = array<i64: 36, 128>}, {transform_indices = @transform_2, window_bounds = array<i64: 1, 128>}, {transform_indices = @transform_3, window_bounds = array<i64: 1, 128>}, {transform_indices = @transform_4, window_bounds = array<i64: 1, 128>}, {transform_indices = @transform_5, window_bounds = array<i64: 1, 1, 128>}, {transform_indices = @transform_6, window_bounds = array<i64: 1, 1, 128>}, {transform_indices = @transform_7, window_bounds = array<i64: 1, 256, 128>}]} {
    %c0 = arith.constant 0 : index
    %c0_0 = arith.constant 0 : index
    %c0_1 = arith.constant 0 : index
    %c0_2 = arith.constant 0 : index
    %0 = vector.load %arg2[%c0, %c0_0, %c0_1, %c0_2] : memref<1x18x18x4xf32, #tpu.memory_space<vmem>>, vector<1x16x16x4xf32>
    %1 = vector.shape_cast %0 : vector<1x16x16x4xf32> to vector<16x16x4xf32>
    %2 = vector.shape_cast %1 : vector<16x16x4xf32> to vector<256x4xf32>
    %c0_3 = arith.constant 0 : index
    %c0_4 = arith.constant 0 : index
    %c1 = arith.constant 1 : index
    %c0_5 = arith.constant 0 : index
    %3 = vector.load %arg2[%c0_3, %c0_4, %c1, %c0_5] : memref<1x18x18x4xf32, #tpu.memory_space<vmem>>, vector<1x16x16x4xf32>
    %4 = vector.shape_cast %3 : vector<1x16x16x4xf32> to vector<16x16x4xf32>
    %5 = vector.shape_cast %4 : vector<16x16x4xf32> to vector<256x4xf32>
    %c0_6 = arith.constant 0 : index
    %c0_7 = arith.constant 0 : index
    %c2 = arith.constant 2 : index
    %c0_8 = arith.constant 0 : index
    %6 = vector.load %arg2[%c0_6, %c0_7, %c2, %c0_8] : memref<1x18x18x4xf32, #tpu.memory_space<vmem>>, vector<1x16x16x4xf32>
    %7 = vector.shape_cast %6 : vector<1x16x16x4xf32> to vector<16x16x4xf32>
    %8 = vector.shape_cast %7 : vector<16x16x4xf32> to vector<256x4xf32>
    %c0_9 = arith.constant 0 : index
    %c1_10 = arith.constant 1 : index
    %c0_11 = arith.constant 0 : index
    %c0_12 = arith.constant 0 : index
    %9 = vector.load %arg2[%c0_9, %c1_10, %c0_11, %c0_12] : memref<1x18x18x4xf32, #tpu.memory_space<vmem>>, vector<1x16x16x4xf32>
    %10 = vector.shape_cast %9 : vector<1x16x16x4xf32> to vector<16x16x4xf32>
    %11 = vector.shape_cast %10 : vector<16x16x4xf32> to vector<256x4xf32>
    %c0_13 = arith.constant 0 : index
    %c1_14 = arith.constant 1 : index
    %c1_15 = arith.constant 1 : index
    %c0_16 = arith.constant 0 : index
    %12 = vector.load %arg2[%c0_13, %c1_14, %c1_15, %c0_16] : memref<1x18x18x4xf32, #tpu.memory_space<vmem>>, vector<1x16x16x4xf32>
    %13 = vector.shape_cast %12 : vector<1x16x16x4xf32> to vector<16x16x4xf32>
    %14 = vector.shape_cast %13 : vector<16x16x4xf32> to vector<256x4xf32>
    %c0_17 = arith.constant 0 : index
    %c1_18 = arith.constant 1 : index
    %c2_19 = arith.constant 2 : index
    %c0_20 = arith.constant 0 : index
    %15 = vector.load %arg2[%c0_17, %c1_18, %c2_19, %c0_20] : memref<1x18x18x4xf32, #tpu.memory_space<vmem>>, vector<1x16x16x4xf32>
    %16 = vector.shape_cast %15 : vector<1x16x16x4xf32> to vector<16x16x4xf32>
    %17 = vector.shape_cast %16 : vector<16x16x4xf32> to vector<256x4xf32>
    %c0_21 = arith.constant 0 : index
    %c2_22 = arith.constant 2 : index
    %c0_23 = arith.constant 0 : index
    %c0_24 = arith.constant 0 : index
    %18 = vector.load %arg2[%c0_21, %c2_22, %c0_23, %c0_24] : memref<1x18x18x4xf32, #tpu.memory_space<vmem>>, vector<1x16x16x4xf32>
    %19 = vector.shape_cast %18 : vector<1x16x16x4xf32> to vector<16x16x4xf32>
    %20 = vector.shape_cast %19 : vector<16x16x4xf32> to vector<256x4xf32>
    %c0_25 = arith.constant 0 : index
    %c2_26 = arith.constant 2 : index
    %c1_27 = arith.constant 1 : index
    %c0_28 = arith.constant 0 : index
    %21 = vector.load %arg2[%c0_25, %c2_26, %c1_27, %c0_28] : memref<1x18x18x4xf32, #tpu.memory_space<vmem>>, vector<1x16x16x4xf32>
    %22 = vector.shape_cast %21 : vector<1x16x16x4xf32> to vector<16x16x4xf32>
    %23 = vector.shape_cast %22 : vector<16x16x4xf32> to vector<256x4xf32>
    %c0_29 = arith.constant 0 : index
    %c2_30 = arith.constant 2 : index
    %c2_31 = arith.constant 2 : index
    %c0_32 = arith.constant 0 : index
    %24 = vector.load %arg2[%c0_29, %c2_30, %c2_31, %c0_32] : memref<1x18x18x4xf32, #tpu.memory_space<vmem>>, vector<1x16x16x4xf32>
    %25 = vector.shape_cast %24 : vector<1x16x16x4xf32> to vector<16x16x4xf32>
    %26 = vector.shape_cast %25 : vector<16x16x4xf32> to vector<256x4xf32>
    %27 = tpu.concatenate %2, %5, %8, %11, %14, %17, %20, %23, %26 in 1 : vector<256x4xf32>, vector<256x4xf32>, vector<256x4xf32>, vector<256x4xf32>, vector<256x4xf32>, vector<256x4xf32>, vector<256x4xf32>, vector<256x4xf32>, vector<256x4xf32> -> vector<256x36xf32>
    %c0_33 = arith.constant 0 : index
    %c0_34 = arith.constant 0 : index
    %28 = vector.load %arg3[%c0_33, %c0_34] : memref<36x128xf32, #tpu.memory_space<vmem>>, vector<36x128xf32>
    %cst = arith.constant dense<0.000000e+00> : vector<256x128xf32>
    %29 = tpu.matmul %27, %28, %cst {dimension_numbers = #tpu.dot_dimension_numbers<[1], [0], [0], [1], [0, 0, 1, 1], [], []>} : vector<256x36xf32>, vector<36x128xf32>, vector<256x128xf32> -> vector<256x128xf32>
    %c0_35 = arith.constant 0 : index
    %c0_36 = arith.constant 0 : index
    %30 = vector.load %arg4[%c0_35, %c0_36] : memref<1x128xf32, #tpu.memory_space<vmem>>, vector<1x128xf32>
    %31 = vector.broadcast %30 : vector<1x128xf32> to vector<256x128xf32>
    %32 = arith.addf %29, %31 : vector<256x128xf32>
    %cst_37 = arith.constant dense<0.000000e+00> : vector<128xf32>
    %33 = vector.multi_reduction <add>, %32, %cst_37 [0] : vector<256x128xf32> to vector<128xf32>
    %34 = vector.shape_cast %33 : vector<128xf32> to vector<1x128xf32>
    %35 = arith.mulf %32, %32 : vector<256x128xf32>
    %cst_38 = arith.constant dense<0.000000e+00> : vector<128xf32>
    %36 = vector.multi_reduction <add>, %35, %cst_38 [0] : vector<256x128xf32> to vector<128xf32>
    %37 = vector.shape_cast %36 : vector<128xf32> to vector<1x128xf32>
    %cst_39 = arith.constant 3.906250e-03 : f32
    %38 = vector.broadcast %cst_39 : f32 to vector<1x128xf32>
    %39 = arith.mulf %34, %38 : vector<1x128xf32>
    %cst_40 = arith.constant 3.906250e-03 : f32
    %40 = vector.broadcast %cst_40 : f32 to vector<1x128xf32>
    %41 = arith.mulf %37, %40 : vector<1x128xf32>
    %42 = arith.mulf %39, %39 : vector<1x128xf32>
    %43 = arith.subf %41, %42 : vector<1x128xf32>
    %cst_41 = arith.constant 9.99999974E-6 : f32
    %44 = vector.broadcast %cst_41 : f32 to vector<1x128xf32>
    %45 = arith.addf %43, %44 : vector<1x128xf32>
    %46 = math.rsqrt %45 : vector<1x128xf32>
    %47 = vector.broadcast %39 : vector<1x128xf32> to vector<256x128xf32>
    %48 = arith.subf %32, %47 : vector<256x128xf32>
    %c0_42 = arith.constant 0 : index
    %c0_43 = arith.constant 0 : index
    %49 = vector.load %arg5[%c0_42, %c0_43] : memref<1x128xf32, #tpu.memory_space<vmem>>, vector<1x128xf32>
    %50 = arith.mulf %46, %49 : vector<1x128xf32>
    %51 = vector.broadcast %50 : vector<1x128xf32> to vector<256x128xf32>
    %52 = arith.mulf %48, %51 : vector<256x128xf32>
    %c0_44 = arith.constant 0 : index
    %c0_45 = arith.constant 0 : index
    %53 = vector.load %arg6[%c0_44, %c0_45] : memref<1x128xf32, #tpu.memory_space<vmem>>, vector<1x128xf32>
    %54 = vector.broadcast %53 : vector<1x128xf32> to vector<256x128xf32>
    %55 = arith.addf %52, %54 : vector<256x128xf32>
    %c0_46 = arith.constant 0 : index
    %c0_47 = arith.constant 0 : index
    %c0_48 = arith.constant 0 : index
    %56 = vector.load %arg7[%c0_46, %c0_47, %c0_48] : memref<1x1x128xf32, #tpu.memory_space<vmem>>, vector<1x1x128xf32>
    %57 = vector.shape_cast %56 : vector<1x1x128xf32> to vector<1x128xf32>
    %cst_49 = arith.constant 1.000000e+00 : f32
    %58 = vector.broadcast %cst_49 : f32 to vector<1x128xf32>
    %59 = arith.addf %57, %58 : vector<1x128xf32>
    %60 = vector.broadcast %59 : vector<1x128xf32> to vector<256x128xf32>
    %61 = arith.mulf %55, %60 : vector<256x128xf32>
    %c0_50 = arith.constant 0 : index
    %c0_51 = arith.constant 0 : index
    %c0_52 = arith.constant 0 : index
    %62 = vector.load %arg8[%c0_50, %c0_51, %c0_52] : memref<1x1x128xf32, #tpu.memory_space<vmem>>, vector<1x1x128xf32>
    %63 = vector.shape_cast %62 : vector<1x1x128xf32> to vector<1x128xf32>
    %64 = vector.broadcast %63 : vector<1x128xf32> to vector<256x128xf32>
    %65 = arith.addf %61, %64 : vector<256x128xf32>
    %66 = arith.negf %65 : vector<256x128xf32>
    %67 = math.exp %66 : vector<256x128xf32>
    %cst_53 = arith.constant 1.000000e+00 : f32
    %68 = vector.broadcast %cst_53 : f32 to vector<256x128xf32>
    %69 = arith.addf %68, %67 : vector<256x128xf32>
    %70 = arith.divf %68, %69 : vector<256x128xf32>
    %71 = arith.mulf %65, %70 : vector<256x128xf32>
    %c0_54 = arith.constant 0 : index
    %c0_55 = arith.constant 0 : index
    %c0_56 = arith.constant 0 : index
    %72 = vector.load %arg9[%c0_54, %c0_55, %c0_56] : memref<1x256x128xf32, #tpu.memory_space<vmem>>, vector<1x256x128xf32>
    %73 = vector.shape_cast %72 : vector<1x256x128xf32> to vector<256x128xf32>
    %74 = vector.shape_cast %71 : vector<256x128xf32> to vector<1x256x128xf32>
    tpu.vector_store %arg9[%c0_54, %c0_55, %c0_56], %74 {strides = array<i32>} : memref<1x256x128xf32, #tpu.memory_space<vmem>>, vector<1x256x128xf32>,
    return
  }
  func.func @transform_0(%arg0: i32, %arg1: i32) -> (i32, i32, i32, i32) {
    %c0_i32 = arith.constant 0 : i32
    %c0_i32_0 = arith.constant 0 : i32
    %c0_i32_1 = arith.constant 0 : i32
    %c0_i32_2 = arith.constant 0 : i32
    return %arg0, %c0_i32, %c0_i32_0, %c0_i32_1 : i32, i32, i32, i32
  }
  func.func @transform_1(%arg0: i32, %arg1: i32) -> (i32, i32) {
    %c0_i32 = arith.constant 0 : i32
    %c0_i32_0 = arith.constant 0 : i32
    return %c0_i32, %arg1 : i32, i32
  }
  func.func @transform_2(%arg0: i32, %arg1: i32) -> (i32, i32) {
    %c0_i32 = arith.constant 0 : i32
    %c0_i32_0 = arith.constant 0 : i32
    return %c0_i32, %arg1 : i32, i32
  }
  func.func @transform_3(%arg0: i32, %arg1: i32) -> (i32, i32) {
    %c0_i32 = arith.constant 0 : i32
    %c0_i32_0 = arith.constant 0 : i32
    return %c0_i32, %arg1 : i32, i32
  }
  func.func @transform_4(%arg0: i32, %arg1: i32) -> (i32, i32) {
    %c0_i32 = arith.constant 0 : i32
    %c0_i32_0 = arith.constant 0 : i32
    return %c0_i32, %arg1 : i32, i32
  }
  func.func @transform_5(%arg0: i32, %arg1: i32) -> (i32, i32, i32) {
    %c0_i32 = arith.constant 0 : i32
    %c0_i32_0 = arith.constant 0 : i32
    return %arg0, %c0_i32, %arg1 : i32, i32, i32
  }
  func.func @transform_6(%arg0: i32, %arg1: i32) -> (i32, i32, i32) {
    %c0_i32 = arith.constant 0 : i32
    %c0_i32_0 = arith.constant 0 : i32
    return %arg0, %c0_i32, %arg1 : i32, i32, i32
  }
  func.func @transform_7(%arg0: i32, %arg1: i32) -> (i32, i32, i32) {
    %c0_i32 = arith.constant 0 : i32
    %c0_i32_0 = arith.constant 0 : i32
    return %arg0, %c0_i32, %arg1 : i32, i32, i32
  }
}

</mosaic_0001>

<llo_original>
// kernel: tpu_custom_call.1
$region0: #{tpu_custom_call.1}
  #allocation0 [shape = 'u32[]', space=smem, size = 0x4, offset = 0x4, fixed_abs, tag = 'smem constant byte address 0x4 - core index']
  #allocation1 [shape = 'u32[72,128]{1,0:T(1,128)}', space=vmem, size = 0x9000, scoped, tag = 'internal scratch']
  %s0 = inlined_call_operand.vmem [shape: f32[2,18,18,4], index: 0, kind: input, shape index: {}]
  %s1 = inlined_call_operand.vmem [shape: f32[36,128], index: 1, kind: input, shape index: {}]
  %s2 = inlined_call_operand.vmem [shape: f32[1,128], index: 2, kind: input, shape index: {}]
  %s3 = inlined_call_operand.vmem [shape: f32[1,128], index: 3, kind: input, shape index: {}]
  %s4 = inlined_call_operand.vmem [shape: f32[1,128], index: 4, kind: input, shape index: {}]
  %s5 = inlined_call_operand.vmem [shape: f32[2,1,128], index: 5, kind: input, shape index: {}]
  %s6 = inlined_call_operand.vmem [shape: f32[2,1,128], index: 6, kind: input, shape index: {}]
  %s7 = inlined_call_operand.hbm [shape: f32[2,256,128], index: 7, kind: output, shape index: {}]
  %s8 = sld [smem:[#allocation0]]
  $region61: #{tpu_custom_call.1} parent=0
    _
  %s10 = ssub.s32 1, %s8
  %s11 = scalar_select 0, %s10, %s8
  $region1: #{tpu_custom_call.1} parent=0
    #allocation2 [shape = 'u8[262144]{0}', space=vmem, size = 0x40000, scoped, tag = 'output window, operand 0']
    #allocation3 [shape = 's32[2]{0}', space=sflag, size = 0x8, scoped, tag = 'scoped memory for tpu_custom_call.1']
    %12 = vsyncpa [#allocation3], 0
    %s13 = scalar_lea.sflag [#allocation3], 1
    %14 = vsyncpa %s13, 0
    loop: start=0, step=1, limit=4
    $region2: #{tpu_custom_call.1} parent=1 // loop_pre_header
      _
    $region3: #{tpu_custom_call.1} parent=1 // loop_header
      %s16 = sphi 0, %s20
      %p17 = scmp.ge.s32.totalorder %s16, 4
      %s23 = sphi 0, %s35
      %s24 = sphi 0, %s31
      %s25 = sphi 0, %s23
      %s26 = sphi 0, %s24
      %s27 = sphi 0, %s25
      %s28 = sphi 0, %s26
      %s38 = sphi 0, %s40
      %s41 = sphi 0, %s38
      %s42 = sphi 0, %s41
      %s58 = sphi 0, %s42
      %s64 = sphi 0, %s66
      %s67 = sphi 0, %s64
      %s68 = sphi 0, %s67
      %s84 = sphi 0, %s68
      %s90 = sphi 0, %s92
      %s93 = sphi 0, %s90
      %s94 = sphi 0, %s93
      %s110 = sphi 0, %s94
      %s116 = sphi 0, %s118
      %s119 = sphi 0, %s116
      %s120 = sphi 0, %s119
      %s136 = sphi 0, %s120
      %s142 = sphi 0, %s144
      %s145 = sphi 0, %s142
      %s146 = sphi 0, %s145
      %s162 = sphi 0, %s146
      %s170 = sphi 0, %s172
      %s173 = sphi 0, %s170
      %s174 = sphi 0, %s173
      %s190 = sphi 0, %s174
      %s198 = sphi 0, %s200
      %s201 = sphi 0, %s198
      %s202 = sphi 0, %s201
      %s218 = sphi 0, %s202
      %s226 = sphi 0, %s228
      %s229 = sphi 0, %s226
      %s230 = sphi 0, %s229
      %s246 = sphi 0, %s230
    $region4: #{tpu_custom_call.1} parent=1 // loop_header_branch
      %19 = sbr.rel (%p17) target = $region8
    $region5: #{tpu_custom_call.1} parent=1 // loop_body
      %s21 = ssub.s32 %s16, 1
      %s22 = ssub.s32 %s16, 2
      %s29 = sadd.s32 1, %s24
      %p30 = scmp.ge.s32.totalorder %s29, 1
      %s31 = scalar_select %p30, 0, %s29
      %s32 = sadd.s32 1, %s23
      %s33 = scalar_select %p30, %s32, %s23
      %p34 = scmp.ge.s32.totalorder %s33, 2
      %s35 = scalar_select %p34, 0, %s33
      %s36 = ssub.s32 %s23, %s35
      %p37 = scmp.eq.s32.totalorder %s36, 0
      %s39 = sadd.s32 %s38, 1
      %s40 = scalar_select %p37, %s38, %s39
      %p43 = pneg %p37
      %p44 = scmp.eq.s32.totalorder %s16, 1
      %p45 = por %p43, %p44
      %p46 = scmp.ne.s32.totalorder %s38, %s41
      %p47 = scmp.eq.s32.totalorder %s16, 0
      %p48 = por %p46, %p47
      %p49 = scmp.ne.s32.totalorder %s38, %s41
      %p50 = scmp.eq.s32.totalorder %s21, 1
      %p51 = por %p49, %p50
      %p52 = scmp.ne.s32.totalorder %s41, %s42
      %p53 = scmp.eq.s32.totalorder %s21, 0
      %p54 = por %p52, %p53
      %p55 = scmp.ne.s32.totalorder %s41, %s42
      %p56 = scmp.eq.s32.totalorder %s22, 1
      %p57 = por %p55, %p56
      %p59 = scmp.ne.s32.totalorder %s42, %s58
      %p60 = scmp.eq.s32.totalorder %s22, 0
      %p61 = por %p59, %p60
      %s62 = ssub.s32 %s24, %s31
      %p63 = scmp.eq.s32.totalorder %s62, 0
      %s65 = sadd.s32 %s64, 1
      %s66 = scalar_select %p63, %s64, %s65
      %p69 = pneg %p63
      %p70 = scmp.eq.s32.totalorder %s16, 1
      %p71 = por %p69, %p70
      %p72 = scmp.ne.s32.totalorder %s64, %s67
      %p73 = scmp.eq.s32.totalorder %s16, 0
      %p74 = por %p72, %p73
      %p75 = scmp.ne.s32.totalorder %s64, %s67
      %p76 = scmp.eq.s32.totalorder %s21, 1
      %p77 = por %p75, %p76
      %p78 = scmp.ne.s32.totalorder %s67, %s68
      %p79 = scmp.eq.s32.totalorder %s21, 0
      %p80 = por %p78, %p79
      %p81 = scmp.ne.s32.totalorder %s67, %s68
      %p82 = scmp.eq.s32.totalorder %s22, 1
      %p83 = por %p81, %p82
      %p85 = scmp.ne.s32.totalorder %s68, %s84
      %p86 = scmp.eq.s32.totalorder %s22, 0
      %p87 = por %p85, %p86
      %s88 = ssub.s32 %s24, %s31
      %p89 = scmp.eq.s32.totalorder %s88, 0
      %s91 = sadd.s32 %s90, 1
      %s92 = scalar_select %p89, %s90, %s91
      %p95 = pneg %p89
      %p96 = scmp.eq.s32.totalorder %s16, 1
      %p97 = por %p95, %p96
      %p98 = scmp.ne.s32.totalorder %s90, %s93
      %p99 = scmp.eq.s32.totalorder %s16, 0
      %p100 = por %p98, %p99
      %p101 = scmp.ne.s32.totalorder %s90, %s93
      %p102 = scmp.eq.s32.totalorder %s21, 1
      %p103 = por %p101, %p102
      %p104 = scmp.ne.s32.totalorder %s93, %s94
      %p105 = scmp.eq.s32.totalorder %s21, 0
      %p106 = por %p104, %p105
      %p107 = scmp.ne.s32.totalorder %s93, %s94
      %p108 = scmp.eq.s32.totalorder %s22, 1
      %p109 = por %p107, %p108
      %p111 = scmp.ne.s32.totalorder %s94, %s110
      %p112 = scmp.eq.s32.totalorder %s22, 0
      %p113 = por %p111, %p112
      %s114 = ssub.s32 %s24, %s31
      %p115 = scmp.eq.s32.totalorder %s114, 0
      %s117 = sadd.s32 %s116, 1
      %s118 = scalar_select %p115, %s116, %s117
      %p121 = pneg %p115
      %p122 = scmp.eq.s32.totalorder %s16, 1
      %p123 = por %p121, %p122
      %p124 = scmp.ne.s32.totalorder %s116, %s119
      %p125 = scmp.eq.s32.totalorder %s16, 0
      %p126 = por %p124, %p125
      %p127 = scmp.ne.s32.totalorder %s116, %s119
      %p128 = scmp.eq.s32.totalorder %s21, 1
      %p129 = por %p127, %p128
      %p130 = scmp.ne.s32.totalorder %s119, %s120
      %p131 = scmp.eq.s32.totalorder %s21, 0
      %p132 = por %p130, %p131
      %p133 = scmp.ne.s32.totalorder %s119, %s120
      %p134 = scmp.eq.s32.totalorder %s22, 1
      %p135 = por %p133, %p134
      %p137 = scmp.ne.s32.totalorder %s120, %s136
      %p138 = scmp.eq.s32.totalorder %s22, 0
      %p139 = por %p137, %p138
      %s140 = ssub.s32 %s24, %s31
      %p141 = scmp.eq.s32.totalorder %s140, 0
      %s143 = sadd.s32 %s142, 1
      %s144 = scalar_select %p141, %s142, %s143
      %p147 = pneg %p141
      %p148 = scmp.eq.s32.totalorder %s16, 1
      %p149 = por %p147, %p148
      %p150 = scmp.ne.s32.totalorder %s142, %s145
      %p151 = scmp.eq.s32.totalorder %s16, 0
      %p152 = por %p150, %p151
      %p153 = scmp.ne.s32.totalorder %s142, %s145
      %p154 = scmp.eq.s32.totalorder %s21, 1
      %p155 = por %p153, %p154
      %p156 = scmp.ne.s32.totalorder %s145, %s146
      %p157 = scmp.eq.s32.totalorder %s21, 0
      %p158 = por %p156, %p157
      %p159 = scmp.ne.s32.totalorder %s145, %s146
      %p160 = scmp.eq.s32.totalorder %s22, 1
      %p161 = por %p159, %p160
      %p163 = scmp.ne.s32.totalorder %s146, %s162
      %p164 = scmp.eq.s32.totalorder %s22, 0
      %p165 = por %p163, %p164
      %s166 = ssub.s32 %s23, %s35
      %s167 = ssub.s32 %s24, %s31
      %s168 = sor.u32 %s166, %s167
      %p169 = scmp.eq.s32.totalorder %s168, 0
      %s171 = sadd.s32 %s170, 1
      %s172 = scalar_select %p169, %s170, %s171
      %p175 = pneg %p169
      %p176 = scmp.eq.s32.totalorder %s16, 1
      %p177 = por %p175, %p176
      %p178 = scmp.ne.s32.totalorder %s170, %s173
      %p179 = scmp.eq.s32.totalorder %s16, 0
      %p180 = por %p178, %p179
      %p181 = scmp.ne.s32.totalorder %s170, %s173
      %p182 = scmp.eq.s32.totalorder %s21, 1
      %p183 = por %p181, %p182
      %p184 = scmp.ne.s32.totalorder %s173, %s174
      %p185 = scmp.eq.s32.totalorder %s21, 0
      %p186 = por %p184, %p185
      %p187 = scmp.ne.s32.totalorder %s173, %s174
      %p188 = scmp.eq.s32.totalorder %s22, 1
      %p189 = por %p187, %p188
      %p191 = scmp.ne.s32.totalorder %s174, %s190
      %p192 = scmp.eq.s32.totalorder %s22, 0
      %p193 = por %p191, %p192
      %s194 = ssub.s32 %s23, %s35
      %s195 = ssub.s32 %s24, %s31
      %s196 = sor.u32 %s194, %s195
      %p197 = scmp.eq.s32.totalorder %s196, 0
      %s199 = sadd.s32 %s198, 1
      %s200 = scalar_select %p197, %s198, %s199
      %p203 = pneg %p197
      %p204 = scmp.eq.s32.totalorder %s16, 1
      %p205 = por %p203, %p204
      %p206 = scmp.ne.s32.totalorder %s198, %s201
      %p207 = scmp.eq.s32.totalorder %s16, 0
      %p208 = por %p206, %p207
      %p209 = scmp.ne.s32.totalorder %s198, %s201
      %p210 = scmp.eq.s32.totalorder %s21, 1
      %p211 = por %p209, %p210
      %p212 = scmp.ne.s32.totalorder %s201, %s202
      %p213 = scmp.eq.s32.totalorder %s21, 0
      %p214 = por %p212, %p213
      %p215 = scmp.ne.s32.totalorder %s201, %s202
      %p216 = scmp.eq.s32.totalorder %s22, 1
      %p217 = por %p215, %p216
      %p219 = scmp.ne.s32.totalorder %s202, %s218
      %p220 = scmp.eq.s32.totalorder %s22, 0
      %p221 = por %p219, %p220
      %s222 = ssub.s32 %s23, %s35
      %s223 = ssub.s32 %s24, %s31
      %s224 = sor.u32 %s222, %s223
      %p225 = scmp.eq.s32.totalorder %s224, 0
      %s227 = sadd.s32 %s226, 1
      %s228 = scalar_select %p225, %s226, %s227
      %p231 = pneg %p225
      %p232 = scmp.eq.s32.totalorder %s16, 1
      %p233 = por %p231, %p232
      %p234 = scmp.ne.s32.totalorder %s226, %s229
      %p235 = scmp.eq.s32.totalorder %s16, 0
      %p236 = por %p234, %p235
      %p237 = scmp.ne.s32.totalorder %s226, %s229
      %p238 = scmp.eq.s32.totalorder %s21, 1
      %p239 = por %p237, %p238
      %p240 = scmp.ne.s32.totalorder %s229, %s230
      %p241 = scmp.eq.s32.totalorder %s21, 0
      %p242 = por %p240, %p241
      %p243 = scmp.ne.s32.totalorder %s229, %s230
      %p244 = scmp.eq.s32.totalorder %s22, 1
      %p245 = por %p243, %p244
      %p247 = scmp.ne.s32.totalorder %s230, %s246
      %p248 = scmp.eq.s32.totalorder %s22, 0
      %p249 = por %p247, %p248
      %p250 = scmp.le.s32.totalorder 1, %s16
      %p251 = scmp.lt.s32.totalorder %s16, 3
      %p252 = pnand %p250, %p251
      %p253 = pneg %p252
      // Predicated region
      $region9: #{tpu_custom_call.1} parent=5 // pred_check
        _
      $region10: #{tpu_custom_call.1} parent=5 // pred_check_branch
        %255 = sbr.rel (%p252) target = $region12
      $region11: #{tpu_custom_call.1} parent=5 // pred_region
        %s256 = ssub.s32 %s16, 1
        // Predicated region
        $region13: #{tpu_custom_call.1} parent=11 // pred_check
          %p257 = pneg %p80
        $region14: #{tpu_custom_call.1} parent=11 // pred_check_branch
          %259 = sbr.rel (%p257) target = $region16
        $region15: #{tpu_custom_call.1} parent=11 // pred_region
          %p260 = scmp.lt.s32.totalorder %s26, 0
          %s261 = scalar_select %p260, %s26, 0
          %s262 = smul.addr %s261, 8
          %s263 = scalar_lea.vmem %s1, %s262
        $region16: #{tpu_custom_call.1} parent=11 // pred_fallthru
          _
        // Predicated region
        $region17: #{tpu_custom_call.1} parent=11 // pred_check
          %p264 = pneg %p106
        $region18: #{tpu_custom_call.1} parent=11 // pred_check_branch
          %266 = sbr.rel (%p264) target = $region20
        $region19: #{tpu_custom_call.1} parent=11 // pred_region
          %p267 = scmp.lt.s32.totalorder %s26, 0
          %s268 = scalar_select %p267, %s26, 0
          %s269 = scalar_lea.vmem %s2, %s268
        $region20: #{tpu_custom_call.1} parent=11 // pred_fallthru
          _
        // Predicated region
        $region21: #{tpu_custom_call.1} parent=11 // pred_check
          %p270 = pneg %p132
        $region22: #{tpu_custom_call.1} parent=11 // pred_check_branch
          %272 = sbr.rel (%p270) target = $region24
        $region23: #{tpu_custom_call.1} parent=11 // pred_region
          %p273 = scmp.lt.s32.totalorder %s26, 0
          %s274 = scalar_select %p273, %s26, 0
          %s275 = scalar_lea.vmem %s3, %s274
        $region24: #{tpu_custom_call.1} parent=11 // pred_fallthru
          _
        // Predicated region
        $region25: #{tpu_custom_call.1} parent=11 // pred_check
          %p276 = pneg %p158
        $region26: #{tpu_custom_call.1} parent=11 // pred_check_branch
          %278 = sbr.rel (%p276) target = $region28
        $region27: #{tpu_custom_call.1} parent=11 // pred_region
          %p279 = scmp.lt.s32.totalorder %s26, 0
          %s280 = scalar_select %p279, %s26, 0
          %s281 = scalar_lea.vmem %s4, %s280
        $region28: #{tpu_custom_call.1} parent=11 // pred_fallthru
          _
      $region12: #{tpu_custom_call.1} parent=5 // pred_fallthru
        _
      %p282 = scmp.lt.s32.totalorder %s16, 2
      // Predicated region
      $region29: #{tpu_custom_call.1} parent=5 // pred_check
        %p283 = pneg %p282
      $region30: #{tpu_custom_call.1} parent=5 // pred_check_branch
        %285 = sbr.rel (%p283) target = $region32
      $region31: #{tpu_custom_call.1} parent=5 // pred_region
        // Predicated region
        $region33: #{tpu_custom_call.1} parent=31 // pred_check
          %p286 = pneg %p48
        $region34: #{tpu_custom_call.1} parent=31 // pred_check_branch
          %288 = sbr.rel (%p286) target = $region36
        $region35: #{tpu_custom_call.1} parent=31 // pred_region
          %p289 = scmp.lt.s32.totalorder %s23, 1
          %s290 = scalar_select %p289, %s23, 1
          %s291 = smul.addr %s290, 54
          %s292 = smul.addr %s291, 8
          %s293 = scalar_lea.vmem %s0, %s292
        $region36: #{tpu_custom_call.1} parent=31 // pred_fallthru
          _
        // Predicated region
        $region37: #{tpu_custom_call.1} parent=31 // pred_check
          %p294 = pneg %p180
        $region38: #{tpu_custom_call.1} parent=31 // pred_check_branch
          %296 = sbr.rel (%p294) target = $region40
        $region39: #{tpu_custom_call.1} parent=31 // pred_region
          %p297 = scmp.lt.s32.totalorder %s23, 1
          %s298 = scalar_select %p297, %s23, 1
          %p299 = scmp.lt.s32.totalorder %s24, 0
          %s300 = scalar_select %p299, %s24, 0
          %s301 = sadd.s32 %s300, %s298
          %s302 = scalar_lea.vmem %s5, %s301
        $region40: #{tpu_custom_call.1} parent=31 // pred_fallthru
          _
        // Predicated region
        $region41: #{tpu_custom_call.1} parent=31 // pred_check
          %p303 = pneg %p208
        $region42: #{tpu_custom_call.1} parent=31 // pred_check_branch
          %305 = sbr.rel (%p303) target = $region44
        $region43: #{tpu_custom_call.1} parent=31 // pred_region
          %p306 = scmp.lt.s32.totalorder %s23, 1
          %s307 = scalar_select %p306, %s23, 1
          %p308 = scmp.lt.s32.totalorder %s24, 0
          %s309 = scalar_select %p308, %s24, 0
          %s310 = sadd.s32 %s309, %s307
          %s311 = scalar_lea.vmem %s6, %s310
        $region44: #{tpu_custom_call.1} parent=31 // pred_fallthru
          _
      $region32: #{tpu_custom_call.1} parent=5 // pred_fallthru
        _
      %p312 = scmp.le.s32.totalorder 1, %s16
      %p313 = scmp.lt.s32.totalorder %s16, 3
      %p314 = pnand %p312, %p313
      %p315 = pneg %p314
      // Predicated region
      $region45: #{tpu_custom_call.1} parent=5 // pred_check
        _
      $region46: #{tpu_custom_call.1} parent=5 // pred_check_branch
        %317 = sbr.rel (%p314) target = $region48
      $region47: #{tpu_custom_call.1} parent=5 // pred_region
        %s318 = ssub.s32 %s16, 1
        %p319 = scmp.lt.s32.totalorder %s25, 1
        %s320 = scalar_select %p319, %s25, 1
        %s321 = smul.addr %s320, 54
        %s322 = smul.addr %s321, 8
        %s323 = scalar_lea.vmem %s0, %s322
        %p324 = pneg %p54
        %p325 = pneg %p51
        %p326 = scmp.lt.s32.totalorder %s26, 0
        %s327 = scalar_select %p326, %s26, 0
        %s328 = smul.addr %s327, 8
        %s329 = scalar_lea.vmem %s1, %s328
        %p330 = pneg %p80
        %p331 = pneg %p77
        %p332 = scmp.lt.s32.totalorder %s26, 0
        %s333 = scalar_select %p332, %s26, 0
        %s334 = scalar_lea.vmem %s2, %s333
        %p335 = pneg %p106
        %p336 = pneg %p103
        %p337 = scmp.lt.s32.totalorder %s26, 0
        %s338 = scalar_select %p337, %s26, 0
        %s339 = scalar_lea.vmem %s3, %s338
        %p340 = pneg %p132
        %p341 = pneg %p129
        %p342 = scmp.lt.s32.totalorder %s26, 0
        %s343 = scalar_select %p342, %s26, 0
        %s344 = scalar_lea.vmem %s4, %s343
        %p345 = pneg %p158
        %p346 = pneg %p155
        %p347 = scmp.lt.s32.totalorder %s25, 1
        %s348 = scalar_select %p347, %s25, 1
        %p349 = scmp.lt.s32.totalorder %s26, 0
        %s350 = scalar_select %p349, %s26, 0
        %s351 = sadd.s32 %s350, %s348
        %s352 = scalar_lea.vmem %s5, %s351
        %p353 = pneg %p186
        %p354 = pneg %p183
        %p355 = scmp.lt.s32.totalorder %s25, 1
        %s356 = scalar_select %p355, %s25, 1
        %p357 = scmp.lt.s32.totalorder %s26, 0
        %s358 = scalar_select %p357, %s26, 0
        %s359 = sadd.s32 %s358, %s356
        %s360 = scalar_lea.vmem %s6, %s359
        %p361 = pneg %p214
        %p362 = pneg %p211
        %p363 = pneg %p242
        %p364 = pneg %p239
        %s365 = sand.u32 %s229, 1
        %s366 = scalar_lea.sflag [#allocation3], %s365
        %s367 = sand.u32 %s229, 1
        %s368 = smul.addr %s367, 256
        %s369 = scalar_lea.vmem [#allocation2], %s368
        %p370 = scmp.lt.s32.totalorder %s25, 1
        %s371 = scalar_select %p370, %s25, 1
        %s372 = smul.addr %s371, 54
        %s373 = smul.addr %s372, 8
        %s374 = scalar_lea.vmem %s0, %s373
        %p375 = scmp.lt.s32.totalorder %s26, 0
        %s376 = scalar_select %p375, %s26, 0
        %s377 = smul.addr %s376, 8
        %s378 = scalar_lea.vmem %s1, %s377
        %p379 = scmp.lt.s32.totalorder %s26, 0
        %s380 = scalar_select %p379, %s26, 0
        %s381 = scalar_lea.vmem %s2, %s380
        %p382 = scmp.lt.s32.totalorder %s26, 0
        %s383 = scalar_select %p382, %s26, 0
        %s384 = scalar_lea.vmem %s3, %s383
        %p385 = scmp.lt.s32.totalorder %s26, 0
        %s386 = scalar_select %p385, %s26, 0
        %s387 = scalar_lea.vmem %s4, %s386
        %p388 = scmp.lt.s32.totalorder %s25, 1
        %s389 = scalar_select %p388, %s25, 1
        %p390 = scmp.lt.s32.totalorder %s26, 0
        %s391 = scalar_select %p390, %s26, 0
        %s392 = sadd.s32 %s391, %s389
        %s393 = scalar_lea.vmem %s5, %s392
        %p394 = scmp.lt.s32.totalorder %s25, 1
        %s395 = scalar_select %p394, %s25, 1
        %p396 = scmp.lt.s32.totalorder %s26, 0
        %s397 = scalar_select %p396, %s26, 0
        %s398 = sadd.s32 %s397, %s395
        %s399 = scalar_lea.vmem %s6, %s398
        %v400 = vld [vmem:[%s374] sm:$0xff]
        %v401 = vld [vmem:[%s374 + $0x8] sm:$0xff]
        %v402 = vld [vmem:[%s374 + $0x18] sm:$0xff]
        %v403 = vld [vmem:[%s374 + $0x20] sm:$0xff]
        %v404 = vld [vmem:[%s374 + $0x30] sm:$0xff]
        %v405 = vld [vmem:[%s374 + $0x38] sm:$0xff]
        %v406 = vld [vmem:[%s374 + $0x48] sm:$0xff]
        %v407 = vld [vmem:[%s374 + $0x50] sm:$0xff]
        %v408 = vld [vmem:[%s374 + $0x60] sm:$0xff]
        %v409 = vld [vmem:[%s374 + $0x68] sm:$0xff]
        %v410 = vld [vmem:[%s374 + $0x78] sm:$0xff]
        %v411 = vld [vmem:[%s374 + $0x80] sm:$0xff]
        %v412 = vld [vmem:[%s374 + $0x90] sm:$0xff]
        %v413 = vld [vmem:[%s374 + $0x98] sm:$0xff]
        %v414 = vld [vmem:[%s374 + $0xa8] sm:$0xff]
        %v415 = vld [vmem:[%s374 + $0xb0] sm:$0xff]
        %v416 = vld [vmem:[%s374 + $0xc0] sm:$0xff]
        %v417 = vld [vmem:[%s374 + $0xc8] sm:$0xff]
        %v418 = vld [vmem:[%s374 + $0xd8] sm:$0xff]
        %v419 = vld [vmem:[%s374 + $0xe0] sm:$0xff]
        %v420 = vld [vmem:[%s374 + $0xf0] sm:$0xff]
        %v421 = vld [vmem:[%s374 + $0xf8] sm:$0xff]
        %v422 = vld [vmem:[%s374 + $0x108] sm:$0xff]
        %v423 = vld [vmem:[%s374 + $0x110] sm:$0xff]
        %v424 = vld [vmem:[%s374 + $0x120] sm:$0xff]
        %v425 = vld [vmem:[%s374 + $0x128] sm:$0xff]
        %v426 = vld [vmem:[%s374 + $0x138] sm:$0xff]
        %v427 = vld [vmem:[%s374 + $0x140] sm:$0xff]
        %v428 = vld [vmem:[%s374 + $0x150] sm:$0xff]
        %v429 = vld [vmem:[%s374 + $0x158] sm:$0xff]
        %v430 = vld [vmem:[%s374 + $0x168] sm:$0xff]
        %v431 = vld [vmem:[%s374 + $0x170] sm:$0xff]
        %v432 = vld [vmem:[%s374 + $0x1] sm:$0xff]
        %v433 = vld [vmem:[%s374 + $0x9] sm:$0xff]
        %v434 = vld [vmem:[%s374 + $0x19] sm:$0xff]
        %v435 = vld [vmem:[%s374 + $0x21] sm:$0xff]
        %v436 = vld [vmem:[%s374 + $0x31] sm:$0xff]
        %v437 = vld [vmem:[%s374 + $0x39] sm:$0xff]
        %v438 = vld [vmem:[%s374 + $0x49] sm:$0xff]
        %v439 = vld [vmem:[%s374 + $0x51] sm:$0xff]
        %v440 = vld [vmem:[%s374 + $0x61] sm:$0xff]
        %v441 = vld [vmem:[%s374 + $0x69] sm:$0xff]
        %v442 = vld [vmem:[%s374 + $0x79] sm:$0xff]
        %v443 = vld [vmem:[%s374 + $0x81] sm:$0xff]
        %v444 = vld [vmem:[%s374 + $0x91] sm:$0xff]
        %v445 = vld [vmem:[%s374 + $0x99] sm:$0xff]
        %v446 = vld [vmem:[%s374 + $0xa9] sm:$0xff]
        %v447 = vld [vmem:[%s374 + $0xb1] sm:$0xff]
        %v448 = vld [vmem:[%s374 + $0xc1] sm:$0xff]
        %v449 = vld [vmem:[%s374 + $0xc9] sm:$0xff]
        %v450 = vld [vmem:[%s374 + $0xd9] sm:$0xff]
        %v451 = vld [vmem:[%s374 + $0xe1] sm:$0xff]
        %v452 = vld [vmem:[%s374 + $0xf1] sm:$0xff]
        %v453 = vld [vmem:[%s374 + $0xf9] sm:$0xff]
        %v454 = vld [vmem:[%s374 + $0x109] sm:$0xff]
        %v455 = vld [vmem:[%s374 + $0x111] sm:$0xff]
        %v456 = vld [vmem:[%s374 + $0x121] sm:$0xff]
        %v457 = vld [vmem:[%s374 + $0x129] sm:$0xff]
        %v458 = vld [vmem:[%s374 + $0x139] sm:$0xff]
        %v459 = vld [vmem:[%s374 + $0x141] sm:$0xff]
        %v460 = vld [vmem:[%s374 + $0x151] sm:$0xff]
        %v461 = vld [vmem:[%s374 + $0x159] sm:$0xff]
        %v462 = vld [vmem:[%s374 + $0x169] sm:$0xff]
        %v463 = vld [vmem:[%s374 + $0x171] sm:$0xff]
        %v464 = vld [vmem:[%s374 + $0x2] sm:$0xff]
        %v465 = vld [vmem:[%s374 + $0xa] sm:$0xff]
        %v466 = vld [vmem:[%s374 + $0x1a] sm:$0xff]
        %v467 = vld [vmem:[%s374 + $0x22] sm:$0xff]
        %v468 = vld [vmem:[%s374 + $0x32] sm:$0xff]
        %v469 = vld [vmem:[%s374 + $0x3a] sm:$0xff]
        %v470 = vld [vmem:[%s374 + $0x4a] sm:$0xff]
        %v471 = vld [vmem:[%s374 + $0x52] sm:$0xff]
        %v472 = vld [vmem:[%s374 + $0x62] sm:$0xff]
        %v473 = vld [vmem:[%s374 + $0x6a] sm:$0xff]
        %v474 = vld [vmem:[%s374 + $0x7a] sm:$0xff]
        %v475 = vld [vmem:[%s374 + $0x82] sm:$0xff]
        %v476 = vld [vmem:[%s374 + $0x92] sm:$0xff]
        %v477 = vld [vmem:[%s374 + $0x9a] sm:$0xff]
        %v478 = vld [vmem:[%s374 + $0xaa] sm:$0xff]
        %v479 = vld [vmem:[%s374 + $0xb2] sm:$0xff]
        %v480 = vld [vmem:[%s374 + $0xc2] sm:$0xff]
        %v481 = vld [vmem:[%s374 + $0xca] sm:$0xff]
        %v482 = vld [vmem:[%s374 + $0xda] sm:$0xff]
        %v483 = vld [vmem:[%s374 + $0xe2] sm:$0xff]
        %v484 = vld [vmem:[%s374 + $0xf2] sm:$0xff]
        %v485 = vld [vmem:[%s374 + $0xfa] sm:$0xff]
        %v486 = vld [vmem:[%s374 + $0x10a] sm:$0xff]
        %v487 = vld [vmem:[%s374 + $0x112] sm:$0xff]
        %v488 = vld [vmem:[%s374 + $0x122] sm:$0xff]
        %v489 = vld [vmem:[%s374 + $0x12a] sm:$0xff]
        %v490 = vld [vmem:[%s374 + $0x13a] sm:$0xff]
        %v491 = vld [vmem:[%s374 + $0x142] sm:$0xff]
        %v492 = vld [vmem:[%s374 + $0x152] sm:$0xff]
        %v493 = vld [vmem:[%s374 + $0x15a] sm:$0xff]
        %v494 = vld [vmem:[%s374 + $0x16a] sm:$0xff]
        %v495 = vld [vmem:[%s374 + $0x172] sm:$0xff]
        %s496 = scalar_lea.vmem %s374, 24
        %v497 = vld [vmem:[%s496] sm:$0xff]
        %v498 = vld [vmem:[%s496 + $0x8] sm:$0xff]
        %v499 = vld [vmem:[%s496 + $0x18] sm:$0xff]
        %v500 = vld [vmem:[%s496 + $0x20] sm:$0xff]
        %v501 = vld [vmem:[%s496 + $0x30] sm:$0xff]
        %v502 = vld [vmem:[%s496 + $0x38] sm:$0xff]
        %v503 = vld [vmem:[%s496 + $0x48] sm:$0xff]
        %v504 = vld [vmem:[%s496 + $0x50] sm:$0xff]
        %v505 = vld [vmem:[%s496 + $0x60] sm:$0xff]
        %v506 = vld [vmem:[%s496 + $0x68] sm:$0xff]
        %v507 = vld [vmem:[%s496 + $0x78] sm:$0xff]
        %v508 = vld [vmem:[%s496 + $0x80] sm:$0xff]
        %v509 = vld [vmem:[%s496 + $0x90] sm:$0xff]
        %v510 = vld [vmem:[%s496 + $0x98] sm:$0xff]
        %v511 = vld [vmem:[%s496 + $0xa8] sm:$0xff]
        %v512 = vld [vmem:[%s496 + $0xb0] sm:$0xff]
        %v513 = vld [vmem:[%s496 + $0xc0] sm:$0xff]
        %v514 = vld [vmem:[%s496 + $0xc8] sm:$0xff]
        %v515 = vld [vmem:[%s496 + $0xd8] sm:$0xff]
        %v516 = vld [vmem:[%s496 + $0xe0] sm:$0xff]
        %v517 = vld [vmem:[%s496 + $0xf0] sm:$0xff]
        %v518 = vld [vmem:[%s496 + $0xf8] sm:$0xff]
        %v519 = vld [vmem:[%s496 + $0x108] sm:$0xff]
        %v520 = vld [vmem:[%s496 + $0x110] sm:$0xff]
        %v521 = vld [vmem:[%s496 + $0x120] sm:$0xff]
        %v522 = vld [vmem:[%s496 + $0x128] sm:$0xff]
        %v523 = vld [vmem:[%s496 + $0x138] sm:$0xff]
        %v524 = vld [vmem:[%s496 + $0x140] sm:$0xff]
        %v525 = vld [vmem:[%s496 + $0x150] sm:$0xff]
        %v526 = vld [vmem:[%s496 + $0x158] sm:$0xff]
        %v527 = vld [vmem:[%s496 + $0x168] sm:$0xff]
        %v528 = vld [vmem:[%s496 + $0x170] sm:$0xff]
        %v529 = vld [vmem:[%s496 + $0x1] sm:$0xff]
        %v530 = vld [vmem:[%s496 + $0x9] sm:$0xff]
        %v531 = vld [vmem:[%s496 + $0x19] sm:$0xff]
        %v532 = vld [vmem:[%s496 + $0x21] sm:$0xff]
        %v533 = vld [vmem:[%s496 + $0x31] sm:$0xff]
        %v534 = vld [vmem:[%s496 + $0x39] sm:$0xff]
        %v535 = vld [vmem:[%s496 + $0x49] sm:$0xff]
        %v536 = vld [vmem:[%s496 + $0x51] sm:$0xff]
        %v537 = vld [vmem:[%s496 + $0x61] sm:$0xff]
        %v538 = vld [vmem:[%s496 + $0x69] sm:$0xff]
        %v539 = vld [vmem:[%s496 + $0x79] sm:$0xff]
        %v540 = vld [vmem:[%s496 + $0x81] sm:$0xff]
        %v541 = vld [vmem:[%s496 + $0x91] sm:$0xff]
        %v542 = vld [vmem:[%s496 + $0x99] sm:$0xff]
        %v543 = vld [vmem:[%s496 + $0xa9] sm:$0xff]
        %v544 = vld [vmem:[%s496 + $0xb1] sm:$0xff]
        %v545 = vld [vmem:[%s496 + $0xc1] sm:$0xff]
        %v546 = vld [vmem:[%s496 + $0xc9] sm:$0xff]
        %v547 = vld [vmem:[%s496 + $0xd9] sm:$0xff]
        %v548 = vld [vmem:[%s496 + $0xe1] sm:$0xff]
        %v549 = vld [vmem:[%s496 + $0xf1] sm:$0xff]
        %v550 = vld [vmem:[%s496 + $0xf9] sm:$0xff]
        %v551 = vld [vmem:[%s496 + $0x109] sm:$0xff]
        %v552 = vld [vmem:[%s496 + $0x111] sm:$0xff]
        %v553 = vld [vmem:[%s496 + $0x121] sm:$0xff]
        %v554 = vld [vmem:[%s496 + $0x129] sm:$0xff]
        %v555 = vld [vmem:[%s496 + $0x139] sm:$0xff]
        %v556 = vld [vmem:[%s496 + $0x141] sm:$0xff]
        %v557 = vld [vmem:[%s496 + $0x151] sm:$0xff]
        %v558 = vld [vmem:[%s496 + $0x159] sm:$0xff]
        %v559 = vld [vmem:[%s496 + $0x169] sm:$0xff]
        %v560 = vld [vmem:[%s496 + $0x171] sm:$0xff]
        %v561 = vld [vmem:[%s496 + $0x2] sm:$0xff]
        %v562 = vld [vmem:[%s496 + $0xa] sm:$0xff]
        %v563 = vld [vmem:[%s496 + $0x1a] sm:$0xff]
        %v564 = vld [vmem:[%s496 + $0x22] sm:$0xff]
        %v565 = vld [vmem:[%s496 + $0x32] sm:$0xff]
        %v566 = vld [vmem:[%s496 + $0x3a] sm:$0xff]
        %v567 = vld [vmem:[%s496 + $0x4a] sm:$0xff]
        %v568 = vld [vmem:[%s496 + $0x52] sm:$0xff]
        %v569 = vld [vmem:[%s496 + $0x62] sm:$0xff]
        %v570 = vld [vmem:[%s496 + $0x6a] sm:$0xff]
        %v571 = vld [vmem:[%s496 + $0x7a] sm:$0xff]
        %v572 = vld [vmem:[%s496 + $0x82] sm:$0xff]
        %v573 = vld [vmem:[%s496 + $0x92] sm:$0xff]
        %v574 = vld [vmem:[%s496 + $0x9a] sm:$0xff]
        %v575 = vld [vmem:[%s496 + $0xaa] sm:$0xff]
        %v576 = vld [vmem:[%s496 + $0xb2] sm:$0xff]
        %v577 = vld [vmem:[%s496 + $0xc2] sm:$0xff]
        %v578 = vld [vmem:[%s496 + $0xca] sm:$0xff]
        %v579 = vld [vmem:[%s496 + $0xda] sm:$0xff]
        %v580 = vld [vmem:[%s496 + $0xe2] sm:$0xff]
        %v581 = vld [vmem:[%s496 + $0xf2] sm:$0xff]
        %v582 = vld [vmem:[%s496 + $0xfa] sm:$0xff]
        %v583 = vld [vmem:[%s496 + $0x10a] sm:$0xff]
        %v584 = vld [vmem:[%s496 + $0x112] sm:$0xff]
        %v585 = vld [vmem:[%s496 + $0x122] sm:$0xff]
        %v586 = vld [vmem:[%s496 + $0x12a] sm:$0xff]
        %v587 = vld [vmem:[%s496 + $0x13a] sm:$0xff]
        %v588 = vld [vmem:[%s496 + $0x142] sm:$0xff]
        %v589 = vld [vmem:[%s496 + $0x152] sm:$0xff]
        %v590 = vld [vmem:[%s496 + $0x15a] sm:$0xff]
        %v591 = vld [vmem:[%s496 + $0x16a] sm:$0xff]
        %v592 = vld [vmem:[%s496 + $0x172] sm:$0xff]
        %s593 = scalar_lea.vmem %s374, 48
        %v594 = vld [vmem:[%s593] sm:$0xff]
        %v595 = vld [vmem:[%s593 + $0x8] sm:$0xff]
        %v596 = vld [vmem:[%s593 + $0x18] sm:$0xff]
        %v597 = vld [vmem:[%s593 + $0x20] sm:$0xff]
        %v598 = vld [vmem:[%s593 + $0x30] sm:$0xff]
        %v599 = vld [vmem:[%s593 + $0x38] sm:$0xff]
        %v600 = vld [vmem:[%s593 + $0x48] sm:$0xff]
        %v601 = vld [vmem:[%s593 + $0x50] sm:$0xff]
        %v602 = vld [vmem:[%s593 + $0x60] sm:$0xff]
        %v603 = vld [vmem:[%s593 + $0x68] sm:$0xff]
        %v604 = vld [vmem:[%s593 + $0x78] sm:$0xff]
        %v605 = vld [vmem:[%s593 + $0x80] sm:$0xff]
        %v606 = vld [vmem:[%s593 + $0x90] sm:$0xff]
        %v607 = vld [vmem:[%s593 + $0x98] sm:$0xff]
        %v608 = vld [vmem:[%s593 + $0xa8] sm:$0xff]
        %v609 = vld [vmem:[%s593 + $0xb0] sm:$0xff]
        %v610 = vld [vmem:[%s593 + $0xc0] sm:$0xff]
        %v611 = vld [vmem:[%s593 + $0xc8] sm:$0xff]
        %v612 = vld [vmem:[%s593 + $0xd8] sm:$0xff]
        %v613 = vld [vmem:[%s593 + $0xe0] sm:$0xff]
        %v614 = vld [vmem:[%s593 + $0xf0] sm:$0xff]
        %v615 = vld [vmem:[%s593 + $0xf8] sm:$0xff]
        %v616 = vld [vmem:[%s593 + $0x108] sm:$0xff]
        %v617 = vld [vmem:[%s593 + $0x110] sm:$0xff]
        %v618 = vld [vmem:[%s593 + $0x120] sm:$0xff]
        %v619 = vld [vmem:[%s593 + $0x128] sm:$0xff]
        %v620 = vld [vmem:[%s593 + $0x138] sm:$0xff]
        %v621 = vld [vmem:[%s593 + $0x140] sm:$0xff]
        %v622 = vld [vmem:[%s593 + $0x150] sm:$0xff]
        %v623 = vld [vmem:[%s593 + $0x158] sm:$0xff]
        %v624 = vld [vmem:[%s593 + $0x168] sm:$0xff]
        %v625 = vld [vmem:[%s593 + $0x170] sm:$0xff]
        %v626 = vld [vmem:[%s593 + $0x1] sm:$0xff]
        %v627 = vld [vmem:[%s593 + $0x9] sm:$0xff]
        %v628 = vld [vmem:[%s593 + $0x19] sm:$0xff]
        %v629 = vld [vmem:[%s593 + $0x21] sm:$0xff]
        %v630 = vld [vmem:[%s593 + $0x31] sm:$0xff]
        %v631 = vld [vmem:[%s593 + $0x39] sm:$0xff]
        %v632 = vld [vmem:[%s593 + $0x49] sm:$0xff]
        %v633 = vld [vmem:[%s593 + $0x51] sm:$0xff]
        %v634 = vld [vmem:[%s593 + $0x61] sm:$0xff]
        %v635 = vld [vmem:[%s593 + $0x69] sm:$0xff]
        %v636 = vld [vmem:[%s593 + $0x79] sm:$0xff]
        %v637 = vld [vmem:[%s593 + $0x81] sm:$0xff]
        %v638 = vld [vmem:[%s593 + $0x91] sm:$0xff]
        %v639 = vld [vmem:[%s593 + $0x99] sm:$0xff]
        %v640 = vld [vmem:[%s593 + $0xa9] sm:$0xff]
        %v641 = vld [vmem:[%s593 + $0xb1] sm:$0xff]
        %v642 = vld [vmem:[%s593 + $0xc1] sm:$0xff]
        %v643 = vld [vmem:[%s593 + $0xc9] sm:$0xff]
        %v644 = vld [vmem:[%s593 + $0xd9] sm:$0xff]
        %v645 = vld [vmem:[%s593 + $0xe1] sm:$0xff]
        %v646 = vld [vmem:[%s593 + $0xf1] sm:$0xff]
        %v647 = vld [vmem:[%s593 + $0xf9] sm:$0xff]
        %v648 = vld [vmem:[%s593 + $0x109] sm:$0xff]
        %v649 = vld [vmem:[%s593 + $0x111] sm:$0xff]
        %v650 = vld [vmem:[%s593 + $0x121] sm:$0xff]
        %v651 = vld [vmem:[%s593 + $0x129] sm:$0xff]
        %v652 = vld [vmem:[%s593 + $0x139] sm:$0xff]
        %v653 = vld [vmem:[%s593 + $0x141] sm:$0xff]
        %v654 = vld [vmem:[%s593 + $0x151] sm:$0xff]
        %v655 = vld [vmem:[%s593 + $0x159] sm:$0xff]
        %v656 = vld [vmem:[%s593 + $0x169] sm:$0xff]
        %v657 = vld [vmem:[%s593 + $0x171] sm:$0xff]
        %v658 = vld [vmem:[%s593 + $0x2] sm:$0xff]
        %v659 = vld [vmem:[%s593 + $0xa] sm:$0xff]
        %v660 = vld [vmem:[%s593 + $0x1a] sm:$0xff]
        %v661 = vld [vmem:[%s593 + $0x22] sm:$0xff]
        %v662 = vld [vmem:[%s593 + $0x32] sm:$0xff]
        %v663 = vld [vmem:[%s593 + $0x3a] sm:$0xff]
        %v664 = vld [vmem:[%s593 + $0x4a] sm:$0xff]
        %v665 = vld [vmem:[%s593 + $0x52] sm:$0xff]
        %v666 = vld [vmem:[%s593 + $0x62] sm:$0xff]
        %v667 = vld [vmem:[%s593 + $0x6a] sm:$0xff]
        %v668 = vld [vmem:[%s593 + $0x7a] sm:$0xff]
        %v669 = vld [vmem:[%s593 + $0x82] sm:$0xff]
        %v670 = vld [vmem:[%s593 + $0x92] sm:$0xff]
        %v671 = vld [vmem:[%s593 + $0x9a] sm:$0xff]
        %v672 = vld [vmem:[%s593 + $0xaa] sm:$0xff]
        %v673 = vld [vmem:[%s593 + $0xb2] sm:$0xff]
        %v674 = vld [vmem:[%s593 + $0xc2] sm:$0xff]
        %v675 = vld [vmem:[%s593 + $0xca] sm:$0xff]
        %v676 = vld [vmem:[%s593 + $0xda] sm:$0xff]
        %v677 = vld [vmem:[%s593 + $0xe2] sm:$0xff]
        %v678 = vld [vmem:[%s593 + $0xf2] sm:$0xff]
        %v679 = vld [vmem:[%s593 + $0xfa] sm:$0xff]
        %v680 = vld [vmem:[%s593 + $0x10a] sm:$0xff]
        %v681 = vld [vmem:[%s593 + $0x112] sm:$0xff]
        %v682 = vld [vmem:[%s593 + $0x122] sm:$0xff]
        %v683 = vld [vmem:[%s593 + $0x12a] sm:$0xff]
        %v684 = vld [vmem:[%s593 + $0x13a] sm:$0xff]
        %v685 = vld [vmem:[%s593 + $0x142] sm:$0xff]
        %v686 = vld [vmem:[%s593 + $0x152] sm:$0xff]
        %v687 = vld [vmem:[%s593 + $0x15a] sm:$0xff]
        %v688 = vld [vmem:[%s593 + $0x16a] sm:$0xff]
        %v689 = vld [vmem:[%s593 + $0x172] sm:$0xff]
        %722 = vrot.lane.b32.xlu0 %v432, 4
        %v723 = vpop.permute.xlu0 %722
        %724 = vrot.lane.b32.xlu0 %v433, 4
        %v725 = vpop.permute.xlu0 %724
        %726 = vrot.lane.b32.xlu0 %v434, 4
        %v727 = vpop.permute.xlu0 %726
        %728 = vrot.lane.b32.xlu0 %v435, 4
        %v729 = vpop.permute.xlu0 %728
        %730 = vrot.lane.b32.xlu0 %v436, 4
        %v731 = vpop.permute.xlu0 %730
        %732 = vrot.lane.b32.xlu0 %v437, 4
        %v733 = vpop.permute.xlu0 %732
        %734 = vrot.lane.b32.xlu0 %v438, 4
        %v735 = vpop.permute.xlu0 %734
        %736 = vrot.lane.b32.xlu0 %v439, 4
        %v737 = vpop.permute.xlu0 %736
        %738 = vrot.lane.b32.xlu0 %v440, 4
        %v739 = vpop.permute.xlu0 %738
        %740 = vrot.lane.b32.xlu0 %v441, 4
        %v741 = vpop.permute.xlu0 %740
        %742 = vrot.lane.b32.xlu0 %v442, 4
        %v743 = vpop.permute.xlu0 %742
        %744 = vrot.lane.b32.xlu0 %v443, 4
        %v745 = vpop.permute.xlu0 %744
        %746 = vrot.lane.b32.xlu0 %v444, 4
        %v747 = vpop.permute.xlu0 %746
        %748 = vrot.lane.b32.xlu0 %v445, 4
        %v749 = vpop.permute.xlu0 %748
        %750 = vrot.lane.b32.xlu0 %v446, 4
        %v751 = vpop.permute.xlu0 %750
        %752 = vrot.lane.b32.xlu0 %v447, 4
        %v753 = vpop.permute.xlu0 %752
        %754 = vrot.lane.b32.xlu0 %v448, 4
        %v755 = vpop.permute.xlu0 %754
        %756 = vrot.lane.b32.xlu0 %v449, 4
        %v757 = vpop.permute.xlu0 %756
        %758 = vrot.lane.b32.xlu0 %v450, 4
        %v759 = vpop.permute.xlu0 %758
        %760 = vrot.lane.b32.xlu0 %v451, 4
        %v761 = vpop.permute.xlu0 %760
        %762 = vrot.lane.b32.xlu0 %v452, 4
        %v763 = vpop.permute.xlu0 %762
        %764 = vrot.lane.b32.xlu0 %v453, 4
        %v765 = vpop.permute.xlu0 %764
        %766 = vrot.lane.b32.xlu0 %v454, 4
        %v767 = vpop.permute.xlu0 %766
        %768 = vrot.lane.b32.xlu0 %v455, 4
        %v769 = vpop.permute.xlu0 %768
        %770 = vrot.lane.b32.xlu0 %v456, 4
        %v771 = vpop.permute.xlu0 %770
        %772 = vrot.lane.b32.xlu0 %v457, 4
        %v773 = vpop.permute.xlu0 %772
        %774 = vrot.lane.b32.xlu0 %v458, 4
        %v775 = vpop.permute.xlu0 %774
        %776 = vrot.lane.b32.xlu0 %v459, 4
        %v777 = vpop.permute.xlu0 %776
        %778 = vrot.lane.b32.xlu0 %v460, 4
        %v779 = vpop.permute.xlu0 %778
        %780 = vrot.lane.b32.xlu0 %v461, 4
        %v781 = vpop.permute.xlu0 %780
        %782 = vrot.lane.b32.xlu0 %v462, 4
        %v783 = vpop.permute.xlu0 %782
        %784 = vrot.lane.b32.xlu0 %v463, 4
        %v785 = vpop.permute.xlu0 %784
        %850 = vrot.lane.b32.xlu0 %v464, 8
        %v851 = vpop.permute.xlu0 %850
        %852 = vrot.lane.b32.xlu0 %v465, 8
        %v853 = vpop.permute.xlu0 %852
        %854 = vrot.lane.b32.xlu0 %v466, 8
        %v855 = vpop.permute.xlu0 %854
        %856 = vrot.lane.b32.xlu0 %v467, 8
        %v857 = vpop.permute.xlu0 %856
        %858 = vrot.lane.b32.xlu0 %v468, 8
        %v859 = vpop.permute.xlu0 %858
        %860 = vrot.lane.b32.xlu0 %v469, 8
        %v861 = vpop.permute.xlu0 %860
        %862 = vrot.lane.b32.xlu0 %v470, 8
        %v863 = vpop.permute.xlu0 %862
        %864 = vrot.lane.b32.xlu0 %v471, 8
        %v865 = vpop.permute.xlu0 %864
        %866 = vrot.lane.b32.xlu0 %v472, 8
        %v867 = vpop.permute.xlu0 %866
        %868 = vrot.lane.b32.xlu0 %v473, 8
        %v869 = vpop.permute.xlu0 %868
        %870 = vrot.lane.b32.xlu0 %v474, 8
        %v871 = vpop.permute.xlu0 %870
        %872 = vrot.lane.b32.xlu0 %v475, 8
        %v873 = vpop.permute.xlu0 %872
        %874 = vrot.lane.b32.xlu0 %v476, 8
        %v875 = vpop.permute.xlu0 %874
        %876 = vrot.lane.b32.xlu0 %v477, 8
        %v877 = vpop.permute.xlu0 %876
        %878 = vrot.lane.b32.xlu0 %v478, 8
        %v879 = vpop.permute.xlu0 %878
        %880 = vrot.lane.b32.xlu0 %v479, 8
        %v881 = vpop.permute.xlu0 %880
        %882 = vrot.lane.b32.xlu0 %v480, 8
        %v883 = vpop.permute.xlu0 %882
        %884 = vrot.lane.b32.xlu0 %v481, 8
        %v885 = vpop.permute.xlu0 %884
        %886 = vrot.lane.b32.xlu0 %v482, 8
        %v887 = vpop.permute.xlu0 %886
        %888 = vrot.lane.b32.xlu0 %v483, 8
        %v889 = vpop.permute.xlu0 %888
        %890 = vrot.lane.b32.xlu0 %v484, 8
        %v891 = vpop.permute.xlu0 %890
        %892 = vrot.lane.b32.xlu0 %v485, 8
        %v893 = vpop.permute.xlu0 %892
        %894 = vrot.lane.b32.xlu0 %v486, 8
        %v895 = vpop.permute.xlu0 %894
        %896 = vrot.lane.b32.xlu0 %v487, 8
        %v897 = vpop.permute.xlu0 %896
        %898 = vrot.lane.b32.xlu0 %v488, 8
        %v899 = vpop.permute.xlu0 %898
        %900 = vrot.lane.b32.xlu0 %v489, 8
        %v901 = vpop.permute.xlu0 %900
        %902 = vrot.lane.b32.xlu0 %v490, 8
        %v903 = vpop.permute.xlu0 %902
        %904 = vrot.lane.b32.xlu0 %v491, 8
        %v905 = vpop.permute.xlu0 %904
        %906 = vrot.lane.b32.xlu0 %v492, 8
        %v907 = vpop.permute.xlu0 %906
        %908 = vrot.lane.b32.xlu0 %v493, 8
        %v909 = vpop.permute.xlu0 %908
        %910 = vrot.lane.b32.xlu0 %v494, 8
        %v911 = vpop.permute.xlu0 %910
        %912 = vrot.lane.b32.xlu0 %v495, 8
        %v913 = vpop.permute.xlu0 %912
        %978 = vrot.lane.b32.xlu0 %v497, 12
        %v979 = vpop.permute.xlu0 %978
        %980 = vrot.lane.b32.xlu0 %v498, 12
        %v981 = vpop.permute.xlu0 %980
        %982 = vrot.lane.b32.xlu0 %v499, 12
        %v983 = vpop.permute.xlu0 %982
        %984 = vrot.lane.b32.xlu0 %v500, 12
        %v985 = vpop.permute.xlu0 %984
        %986 = vrot.lane.b32.xlu0 %v501, 12
        %v987 = vpop.permute.xlu0 %986
        %988 = vrot.lane.b32.xlu0 %v502, 12
        %v989 = vpop.permute.xlu0 %988
        %990 = vrot.lane.b32.xlu0 %v503, 12
        %v991 = vpop.permute.xlu0 %990
        %992 = vrot.lane.b32.xlu0 %v504, 12
        %v993 = vpop.permute.xlu0 %992
        %994 = vrot.lane.b32.xlu0 %v505, 12
        %v995 = vpop.permute.xlu0 %994
        %996 = vrot.lane.b32.xlu0 %v506, 12
        %v997 = vpop.permute.xlu0 %996
        %998 = vrot.lane.b32.xlu0 %v507, 12
        %v999 = vpop.permute.xlu0 %998
        %1000 = vrot.lane.b32.xlu0 %v508, 12
        %v1001 = vpop.permute.xlu0 %1000
        %1002 = vrot.lane.b32.xlu0 %v509, 12
        %v1003 = vpop.permute.xlu0 %1002
        %1004 = vrot.lane.b32.xlu0 %v510, 12
        %v1005 = vpop.permute.xlu0 %1004
        %1006 = vrot.lane.b32.xlu0 %v511, 12
        %v1007 = vpop.permute.xlu0 %1006
        %1008 = vrot.lane.b32.xlu0 %v512, 12
        %v1009 = vpop.permute.xlu0 %1008
        %1010 = vrot.lane.b32.xlu0 %v513, 12
        %v1011 = vpop.permute.xlu0 %1010
        %1012 = vrot.lane.b32.xlu0 %v514, 12
        %v1013 = vpop.permute.xlu0 %1012
        %1014 = vrot.lane.b32.xlu0 %v515, 12
        %v1015 = vpop.permute.xlu0 %1014
        %1016 = vrot.lane.b32.xlu0 %v516, 12
        %v1017 = vpop.permute.xlu0 %1016
        %1018 = vrot.lane.b32.xlu0 %v517, 12
        %v1019 = vpop.permute.xlu0 %1018
        %1020 = vrot.lane.b32.xlu0 %v518, 12
        %v1021 = vpop.permute.xlu0 %1020
        %1022 = vrot.lane.b32.xlu0 %v519, 12
        %v1023 = vpop.permute.xlu0 %1022
        %1024 = vrot.lane.b32.xlu0 %v520, 12
        %v1025 = vpop.permute.xlu0 %1024
        %1026 = vrot.lane.b32.xlu0 %v521, 12
        %v1027 = vpop.permute.xlu0 %1026
        %1028 = vrot.lane.b32.xlu0 %v522, 12
        %v1029 = vpop.permute.xlu0 %1028
        %1030 = vrot.lane.b32.xlu0 %v523, 12
        %v1031 = vpop.permute.xlu0 %1030
        %1032 = vrot.lane.b32.xlu0 %v524, 12
        %v1033 = vpop.permute.xlu0 %1032
        %1034 = vrot.lane.b32.xlu0 %v525, 12
        %v1035 = vpop.permute.xlu0 %1034
        %1036 = vrot.lane.b32.xlu0 %v526, 12
        %v1037 = vpop.permute.xlu0 %1036
        %1038 = vrot.lane.b32.xlu0 %v527, 12
        %v1039 = vpop.permute.xlu0 %1038
        %1040 = vrot.lane.b32.xlu0 %v528, 12
        %v1041 = vpop.permute.xlu0 %1040
        %1106 = vrot.lane.b32.xlu0 %v529, 16
        %v1107 = vpop.permute.xlu0 %1106
        %1108 = vrot.lane.b32.xlu0 %v530, 16
        %v1109 = vpop.permute.xlu0 %1108
        %1110 = vrot.lane.b32.xlu0 %v531, 16
        %v1111 = vpop.permute.xlu0 %1110
        %1112 = vrot.lane.b32.xlu0 %v532, 16
        %v1113 = vpop.permute.xlu0 %1112
        %1114 = vrot.lane.b32.xlu0 %v533, 16
        %v1115 = vpop.permute.xlu0 %1114
        %1116 = vrot.lane.b32.xlu0 %v534, 16
        %v1117 = vpop.permute.xlu0 %1116
        %1118 = vrot.lane.b32.xlu0 %v535, 16
        %v1119 = vpop.permute.xlu0 %1118
        %1120 = vrot.lane.b32.xlu0 %v536, 16
        %v1121 = vpop.permute.xlu0 %1120
        %1122 = vrot.lane.b32.xlu0 %v537, 16
        %v1123 = vpop.permute.xlu0 %1122
        %1124 = vrot.lane.b32.xlu0 %v538, 16
        %v1125 = vpop.permute.xlu0 %1124
        %1126 = vrot.lane.b32.xlu0 %v539, 16
        %v1127 = vpop.permute.xlu0 %1126
        %1128 = vrot.lane.b32.xlu0 %v540, 16
        %v1129 = vpop.permute.xlu0 %1128
        %1130 = vrot.lane.b32.xlu0 %v541, 16
        %v1131 = vpop.permute.xlu0 %1130
        %1132 = vrot.lane.b32.xlu0 %v542, 16
        %v1133 = vpop.permute.xlu0 %1132
        %1134 = vrot.lane.b32.xlu0 %v543, 16
        %v1135 = vpop.permute.xlu0 %1134
        %1136 = vrot.lane.b32.xlu0 %v544, 16
        %v1137 = vpop.permute.xlu0 %1136
        %1138 = vrot.lane.b32.xlu0 %v545, 16
        %v1139 = vpop.permute.xlu0 %1138
        %1140 = vrot.lane.b32.xlu0 %v546, 16
        %v1141 = vpop.permute.xlu0 %1140
        %1142 = vrot.lane.b32.xlu0 %v547, 16
        %v1143 = vpop.permute.xlu0 %1142
        %1144 = vrot.lane.b32.xlu0 %v548, 16
        %v1145 = vpop.permute.xlu0 %1144
        %1146 = vrot.lane.b32.xlu0 %v549, 16
        %v1147 = vpop.permute.xlu0 %1146
        %1148 = vrot.lane.b32.xlu0 %v550, 16
        %v1149 = vpop.permute.xlu0 %1148
        %1150 = vrot.lane.b32.xlu0 %v551, 16
        %v1151 = vpop.permute.xlu0 %1150
        %1152 = vrot.lane.b32.xlu0 %v552, 16
        %v1153 = vpop.permute.xlu0 %1152
        %1154 = vrot.lane.b32.xlu0 %v553, 16
        %v1155 = vpop.permute.xlu0 %1154
        %1156 = vrot.lane.b32.xlu0 %v554, 16
        %v1157 = vpop.permute.xlu0 %1156
        %1158 = vrot.lane.b32.xlu0 %v555, 16
        %v1159 = vpop.permute.xlu0 %1158
        %1160 = vrot.lane.b32.xlu0 %v556, 16
        %v1161 = vpop.permute.xlu0 %1160
        %1162 = vrot.lane.b32.xlu0 %v557, 16
        %v1163 = vpop.permute.xlu0 %1162
        %1164 = vrot.lane.b32.xlu0 %v558, 16
        %v1165 = vpop.permute.xlu0 %1164
        %1166 = vrot.lane.b32.xlu0 %v559, 16
        %v1167 = vpop.permute.xlu0 %1166
        %1168 = vrot.lane.b32.xlu0 %v560, 16
        %v1169 = vpop.permute.xlu0 %1168
        %1234 = vrot.lane.b32.xlu0 %v561, 20
        %v1235 = vpop.permute.xlu0 %1234
        %1236 = vrot.lane.b32.xlu0 %v562, 20
        %v1237 = vpop.permute.xlu0 %1236
        %1238 = vrot.lane.b32.xlu0 %v563, 20
        %v1239 = vpop.permute.xlu0 %1238
        %1240 = vrot.lane.b32.xlu0 %v564, 20
        %v1241 = vpop.permute.xlu0 %1240
        %1242 = vrot.lane.b32.xlu0 %v565, 20
        %v1243 = vpop.permute.xlu0 %1242
        %1244 = vrot.lane.b32.xlu0 %v566, 20
        %v1245 = vpop.permute.xlu0 %1244
        %1246 = vrot.lane.b32.xlu0 %v567, 20
        %v1247 = vpop.permute.xlu0 %1246
        %1248 = vrot.lane.b32.xlu0 %v568, 20
        %v1249 = vpop.permute.xlu0 %1248
        %1250 = vrot.lane.b32.xlu0 %v569, 20
        %v1251 = vpop.permute.xlu0 %1250
        %1252 = vrot.lane.b32.xlu0 %v570, 20
        %v1253 = vpop.permute.xlu0 %1252
        %1254 = vrot.lane.b32.xlu0 %v571, 20
        %v1255 = vpop.permute.xlu0 %1254
        %1256 = vrot.lane.b32.xlu0 %v572, 20
        %v1257 = vpop.permute.xlu0 %1256
        %1258 = vrot.lane.b32.xlu0 %v573, 20
        %v1259 = vpop.permute.xlu0 %1258
        %1260 = vrot.lane.b32.xlu0 %v574, 20
        %v1261 = vpop.permute.xlu0 %1260
        %1262 = vrot.lane.b32.xlu0 %v575, 20
        %v1263 = vpop.permute.xlu0 %1262
        %1264 = vrot.lane.b32.xlu0 %v576, 20
        %v1265 = vpop.permute.xlu0 %1264
        %1266 = vrot.lane.b32.xlu0 %v577, 20
        %v1267 = vpop.permute.xlu0 %1266
        %1268 = vrot.lane.b32.xlu0 %v578, 20
        %v1269 = vpop.permute.xlu0 %1268
        %1270 = vrot.lane.b32.xlu0 %v579, 20
        %v1271 = vpop.permute.xlu0 %1270
        %1272 = vrot.lane.b32.xlu0 %v580, 20
        %v1273 = vpop.permute.xlu0 %1272
        %1274 = vrot.lane.b32.xlu0 %v581, 20
        %v1275 = vpop.permute.xlu0 %1274
        %1276 = vrot.lane.b32.xlu0 %v582, 20
        %v1277 = vpop.permute.xlu0 %1276
        %1278 = vrot.lane.b32.xlu0 %v583, 20
        %v1279 = vpop.permute.xlu0 %1278
        %1280 = vrot.lane.b32.xlu0 %v584, 20
        %v1281 = vpop.permute.xlu0 %1280
        %1282 = vrot.lane.b32.xlu0 %v585, 20
        %v1283 = vpop.permute.xlu0 %1282
        %1284 = vrot.lane.b32.xlu0 %v586, 20
        %v1285 = vpop.permute.xlu0 %1284
        %1286 = vrot.lane.b32.xlu0 %v587, 20
        %v1287 = vpop.permute.xlu0 %1286
        %1288 = vrot.lane.b32.xlu0 %v588, 20
        %v1289 = vpop.permute.xlu0 %1288
        %1290 = vrot.lane.b32.xlu0 %v589, 20
        %v1291 = vpop.permute.xlu0 %1290
        %1292 = vrot.lane.b32.xlu0 %v590, 20
        %v1293 = vpop.permute.xlu0 %1292
        %1294 = vrot.lane.b32.xlu0 %v591, 20
        %v1295 = vpop.permute.xlu0 %1294
        %1296 = vrot.lane.b32.xlu0 %v592, 20
        %v1297 = vpop.permute.xlu0 %1296
        %1362 = vrot.lane.b32.xlu0 %v594, 24
        %v1363 = vpop.permute.xlu0 %1362
        %1364 = vrot.lane.b32.xlu0 %v595, 24
        %v1365 = vpop.permute.xlu0 %1364
        %1366 = vrot.lane.b32.xlu0 %v596, 24
        %v1367 = vpop.permute.xlu0 %1366
        %1368 = vrot.lane.b32.xlu0 %v597, 24
        %v1369 = vpop.permute.xlu0 %1368
        %1370 = vrot.lane.b32.xlu0 %v598, 24
        %v1371 = vpop.permute.xlu0 %1370
        %1372 = vrot.lane.b32.xlu0 %v599, 24
        %v1373 = vpop.permute.xlu0 %1372
        %1374 = vrot.lane.b32.xlu0 %v600, 24
        %v1375 = vpop.permute.xlu0 %1374
        %1376 = vrot.lane.b32.xlu0 %v601, 24
        %v1377 = vpop.permute.xlu0 %1376
        %1378 = vrot.lane.b32.xlu0 %v602, 24
        %v1379 = vpop.permute.xlu0 %1378
        %1380 = vrot.lane.b32.xlu0 %v603, 24
        %v1381 = vpop.permute.xlu0 %1380
        %1382 = vrot.lane.b32.xlu0 %v604, 24
        %v1383 = vpop.permute.xlu0 %1382
        %1384 = vrot.lane.b32.xlu0 %v605, 24
        %v1385 = vpop.permute.xlu0 %1384
        %1386 = vrot.lane.b32.xlu0 %v606, 24
        %v1387 = vpop.permute.xlu0 %1386
        %1388 = vrot.lane.b32.xlu0 %v607, 24
        %v1389 = vpop.permute.xlu0 %1388
        %1390 = vrot.lane.b32.xlu0 %v608, 24
        %v1391 = vpop.permute.xlu0 %1390
        %1392 = vrot.lane.b32.xlu0 %v609, 24
        %v1393 = vpop.permute.xlu0 %1392
        %1394 = vrot.lane.b32.xlu0 %v610, 24
        %v1395 = vpop.permute.xlu0 %1394
        %1396 = vrot.lane.b32.xlu0 %v611, 24
        %v1397 = vpop.permute.xlu0 %1396
        %1398 = vrot.lane.b32.xlu0 %v612, 24
        %v1399 = vpop.permute.xlu0 %1398
        %1400 = vrot.lane.b32.xlu0 %v613, 24
        %v1401 = vpop.permute.xlu0 %1400
        %1402 = vrot.lane.b32.xlu0 %v614, 24
        %v1403 = vpop.permute.xlu0 %1402
        %1404 = vrot.lane.b32.xlu0 %v615, 24
        %v1405 = vpop.permute.xlu0 %1404
        %1406 = vrot.lane.b32.xlu0 %v616, 24
        %v1407 = vpop.permute.xlu0 %1406
        %1408 = vrot.lane.b32.xlu0 %v617, 24
        %v1409 = vpop.permute.xlu0 %1408
        %1410 = vrot.lane.b32.xlu0 %v618, 24
        %v1411 = vpop.permute.xlu0 %1410
        %1412 = vrot.lane.b32.xlu0 %v619, 24
        %v1413 = vpop.permute.xlu0 %1412
        %1414 = vrot.lane.b32.xlu0 %v620, 24
        %v1415 = vpop.permute.xlu0 %1414
        %1416 = vrot.lane.b32.xlu0 %v621, 24
        %v1417 = vpop.permute.xlu0 %1416
        %1418 = vrot.lane.b32.xlu0 %v622, 24
        %v1419 = vpop.permute.xlu0 %1418
        %1420 = vrot.lane.b32.xlu0 %v623, 24
        %v1421 = vpop.permute.xlu0 %1420
        %1422 = vrot.lane.b32.xlu0 %v624, 24
        %v1423 = vpop.permute.xlu0 %1422
        %1424 = vrot.lane.b32.xlu0 %v625, 24
        %v1425 = vpop.permute.xlu0 %1424
        %1490 = vrot.lane.b32.xlu0 %v626, 28
        %v1491 = vpop.permute.xlu0 %1490
        %1492 = vrot.lane.b32.xlu0 %v627, 28
        %v1493 = vpop.permute.xlu0 %1492
        %1494 = vrot.lane.b32.xlu0 %v628, 28
        %v1495 = vpop.permute.xlu0 %1494
        %1496 = vrot.lane.b32.xlu0 %v629, 28
        %v1497 = vpop.permute.xlu0 %1496
        %1498 = vrot.lane.b32.xlu0 %v630, 28
        %v1499 = vpop.permute.xlu0 %1498
        %1500 = vrot.lane.b32.xlu0 %v631, 28
        %v1501 = vpop.permute.xlu0 %1500
        %1502 = vrot.lane.b32.xlu0 %v632, 28
        %v1503 = vpop.permute.xlu0 %1502
        %1504 = vrot.lane.b32.xlu0 %v633, 28
        %v1505 = vpop.permute.xlu0 %1504
        %1506 = vrot.lane.b32.xlu0 %v634, 28
        %v1507 = vpop.permute.xlu0 %1506
        %1508 = vrot.lane.b32.xlu0 %v635, 28
        %v1509 = vpop.permute.xlu0 %1508
        %1510 = vrot.lane.b32.xlu0 %v636, 28
        %v1511 = vpop.permute.xlu0 %1510
        %1512 = vrot.lane.b32.xlu0 %v637, 28
        %v1513 = vpop.permute.xlu0 %1512
        %1514 = vrot.lane.b32.xlu0 %v638, 28
        %v1515 = vpop.permute.xlu0 %1514
        %1516 = vrot.lane.b32.xlu0 %v639, 28
        %v1517 = vpop.permute.xlu0 %1516
        %1518 = vrot.lane.b32.xlu0 %v640, 28
        %v1519 = vpop.permute.xlu0 %1518
        %1520 = vrot.lane.b32.xlu0 %v641, 28
        %v1521 = vpop.permute.xlu0 %1520
        %1522 = vrot.lane.b32.xlu0 %v642, 28
        %v1523 = vpop.permute.xlu0 %1522
        %1524 = vrot.lane.b32.xlu0 %v643, 28
        %v1525 = vpop.permute.xlu0 %1524
        %1526 = vrot.lane.b32.xlu0 %v644, 28
        %v1527 = vpop.permute.xlu0 %1526
        %1528 = vrot.lane.b32.xlu0 %v645, 28
        %v1529 = vpop.permute.xlu0 %1528
        %1530 = vrot.lane.b32.xlu0 %v646, 28
        %v1531 = vpop.permute.xlu0 %1530
        %1532 = vrot.lane.b32.xlu0 %v647, 28
        %v1533 = vpop.permute.xlu0 %1532
        %1534 = vrot.lane.b32.xlu0 %v648, 28
        %v1535 = vpop.permute.xlu0 %1534
        %1536 = vrot.lane.b32.xlu0 %v649, 28
        %v1537 = vpop.permute.xlu0 %1536
        %1538 = vrot.lane.b32.xlu0 %v650, 28
        %v1539 = vpop.permute.xlu0 %1538
        %1540 = vrot.lane.b32.xlu0 %v651, 28
        %v1541 = vpop.permute.xlu0 %1540
        %1542 = vrot.lane.b32.xlu0 %v652, 28
        %v1543 = vpop.permute.xlu0 %1542
        %1544 = vrot.lane.b32.xlu0 %v653, 28
        %v1545 = vpop.permute.xlu0 %1544
        %1546 = vrot.lane.b32.xlu0 %v654, 28
        %v1547 = vpop.permute.xlu0 %1546
        %1548 = vrot.lane.b32.xlu0 %v655, 28
        %v1549 = vpop.permute.xlu0 %1548
        %1550 = vrot.lane.b32.xlu0 %v656, 28
        %v1551 = vpop.permute.xlu0 %1550
        %1552 = vrot.lane.b32.xlu0 %v657, 28
        %v1553 = vpop.permute.xlu0 %1552
        %1618 = vrot.lane.b32.xlu0 %v658, 32
        %v1619 = vpop.permute.xlu0 %1618
        %1620 = vrot.lane.b32.xlu0 %v659, 32
        %v1621 = vpop.permute.xlu0 %1620
        %1622 = vrot.lane.b32.xlu0 %v660, 32
        %v1623 = vpop.permute.xlu0 %1622
        %1624 = vrot.lane.b32.xlu0 %v661, 32
        %v1625 = vpop.permute.xlu0 %1624
        %1626 = vrot.lane.b32.xlu0 %v662, 32
        %v1627 = vpop.permute.xlu0 %1626
        %1628 = vrot.lane.b32.xlu0 %v663, 32
        %v1629 = vpop.permute.xlu0 %1628
        %1630 = vrot.lane.b32.xlu0 %v664, 32
        %v1631 = vpop.permute.xlu0 %1630
        %1632 = vrot.lane.b32.xlu0 %v665, 32
        %v1633 = vpop.permute.xlu0 %1632
        %1634 = vrot.lane.b32.xlu0 %v666, 32
        %v1635 = vpop.permute.xlu0 %1634
        %1636 = vrot.lane.b32.xlu0 %v667, 32
        %v1637 = vpop.permute.xlu0 %1636
        %1638 = vrot.lane.b32.xlu0 %v668, 32
        %v1639 = vpop.permute.xlu0 %1638
        %1640 = vrot.lane.b32.xlu0 %v669, 32
        %v1641 = vpop.permute.xlu0 %1640
        %1642 = vrot.lane.b32.xlu0 %v670, 32
        %v1643 = vpop.permute.xlu0 %1642
        %1644 = vrot.lane.b32.xlu0 %v671, 32
        %v1645 = vpop.permute.xlu0 %1644
        %1646 = vrot.lane.b32.xlu0 %v672, 32
        %v1647 = vpop.permute.xlu0 %1646
        %1648 = vrot.lane.b32.xlu0 %v673, 32
        %v1649 = vpop.permute.xlu0 %1648
        %1650 = vrot.lane.b32.xlu0 %v674, 32
        %v1651 = vpop.permute.xlu0 %1650
        %1652 = vrot.lane.b32.xlu0 %v675, 32
        %v1653 = vpop.permute.xlu0 %1652
        %1654 = vrot.lane.b32.xlu0 %v676, 32
        %v1655 = vpop.permute.xlu0 %1654
        %1656 = vrot.lane.b32.xlu0 %v677, 32
        %v1657 = vpop.permute.xlu0 %1656
        %1658 = vrot.lane.b32.xlu0 %v678, 32
        %v1659 = vpop.permute.xlu0 %1658
        %1660 = vrot.lane.b32.xlu0 %v679, 32
        %v1661 = vpop.permute.xlu0 %1660
        %1662 = vrot.lane.b32.xlu0 %v680, 32
        %v1663 = vpop.permute.xlu0 %1662
        %1664 = vrot.lane.b32.xlu0 %v681, 32
        %v1665 = vpop.permute.xlu0 %1664
        %1666 = vrot.lane.b32.xlu0 %v682, 32
        %v1667 = vpop.permute.xlu0 %1666
        %1668 = vrot.lane.b32.xlu0 %v683, 32
        %v1669 = vpop.permute.xlu0 %1668
        %1670 = vrot.lane.b32.xlu0 %v684, 32
        %v1671 = vpop.permute.xlu0 %1670
        %1672 = vrot.lane.b32.xlu0 %v685, 32
        %v1673 = vpop.permute.xlu0 %1672
        %1674 = vrot.lane.b32.xlu0 %v686, 32
        %v1675 = vpop.permute.xlu0 %1674
        %1676 = vrot.lane.b32.xlu0 %v687, 32
        %v1677 = vpop.permute.xlu0 %1676
        %1678 = vrot.lane.b32.xlu0 %v688, 32
        %v1679 = vpop.permute.xlu0 %1678
        %1680 = vrot.lane.b32.xlu0 %v689, 32
        %v1681 = vpop.permute.xlu0 %1680
        %vm1714 = vcmask 31744
        %v1715 = vsel %vm1714, %v400, %v723
        %v1716 = vsel %vm1714, %v401, %v725
        %v1717 = vsel %vm1714, %v402, %v727
        %v1718 = vsel %vm1714, %v403, %v729
        %v1719 = vsel %vm1714, %v404, %v731
        %v1720 = vsel %vm1714, %v405, %v733
        %v1721 = vsel %vm1714, %v406, %v735
        %v1722 = vsel %vm1714, %v407, %v737
        %v1723 = vsel %vm1714, %v408, %v739
        %v1724 = vsel %vm1714, %v409, %v741
        %v1725 = vsel %vm1714, %v410, %v743
        %v1726 = vsel %vm1714, %v411, %v745
        %v1727 = vsel %vm1714, %v412, %v747
        %v1728 = vsel %vm1714, %v413, %v749
        %v1729 = vsel %vm1714, %v414, %v751
        %v1730 = vsel %vm1714, %v415, %v753
        %v1731 = vsel %vm1714, %v416, %v755
        %v1732 = vsel %vm1714, %v417, %v757
        %v1733 = vsel %vm1714, %v418, %v759
        %v1734 = vsel %vm1714, %v419, %v761
        %v1735 = vsel %vm1714, %v420, %v763
        %v1736 = vsel %vm1714, %v421, %v765
        %v1737 = vsel %vm1714, %v422, %v767
        %v1738 = vsel %vm1714, %v423, %v769
        %v1739 = vsel %vm1714, %v424, %v771
        %v1740 = vsel %vm1714, %v425, %v773
        %v1741 = vsel %vm1714, %v426, %v775
        %v1742 = vsel %vm1714, %v427, %v777
        %v1743 = vsel %vm1714, %v428, %v779
        %v1744 = vsel %vm1714, %v429, %v781
        %v1745 = vsel %vm1714, %v430, %v783
        %v1746 = vsel %vm1714, %v431, %v785
        %vm1747 = vcmask 64512
        %v1748 = vsel %vm1747, %v1715, %v851
        %v1749 = vsel %vm1747, %v1716, %v853
        %v1750 = vsel %vm1747, %v1717, %v855
        %v1751 = vsel %vm1747, %v1718, %v857
        %v1752 = vsel %vm1747, %v1719, %v859
        %v1753 = vsel %vm1747, %v1720, %v861
        %v1754 = vsel %vm1747, %v1721, %v863
        %v1755 = vsel %vm1747, %v1722, %v865
        %v1756 = vsel %vm1747, %v1723, %v867
        %v1757 = vsel %vm1747, %v1724, %v869
        %v1758 = vsel %vm1747, %v1725, %v871
        %v1759 = vsel %vm1747, %v1726, %v873
        %v1760 = vsel %vm1747, %v1727, %v875
        %v1761 = vsel %vm1747, %v1728, %v877
        %v1762 = vsel %vm1747, %v1729, %v879
        %v1763 = vsel %vm1747, %v1730, %v881
        %v1764 = vsel %vm1747, %v1731, %v883
        %v1765 = vsel %vm1747, %v1732, %v885
        %v1766 = vsel %vm1747, %v1733, %v887
        %v1767 = vsel %vm1747, %v1734, %v889
        %v1768 = vsel %vm1747, %v1735, %v891
        %v1769 = vsel %vm1747, %v1736, %v893
        %v1770 = vsel %vm1747, %v1737, %v895
        %v1771 = vsel %vm1747, %v1738, %v897
        %v1772 = vsel %vm1747, %v1739, %v899
        %v1773 = vsel %vm1747, %v1740, %v901
        %v1774 = vsel %vm1747, %v1741, %v903
        %v1775 = vsel %vm1747, %v1742, %v905
        %v1776 = vsel %vm1747, %v1743, %v907
        %v1777 = vsel %vm1747, %v1744, %v909
        %v1778 = vsel %vm1747, %v1745, %v911
        %v1779 = vsel %vm1747, %v1746, %v913
        %vm1780 = vcmask 97280
        %v1781 = vsel %vm1780, %v1748, %v979
        %v1782 = vsel %vm1780, %v1749, %v981
        %v1783 = vsel %vm1780, %v1750, %v983
        %v1784 = vsel %vm1780, %v1751, %v985
        %v1785 = vsel %vm1780, %v1752, %v987
        %v1786 = vsel %vm1780, %v1753, %v989
        %v1787 = vsel %vm1780, %v1754, %v991
        %v1788 = vsel %vm1780, %v1755, %v993
        %v1789 = vsel %vm1780, %v1756, %v995
        %v1790 = vsel %vm1780, %v1757, %v997
        %v1791 = vsel %vm1780, %v1758, %v999
        %v1792 = vsel %vm1780, %v1759, %v1001
        %v1793 = vsel %vm1780, %v1760, %v1003
        %v1794 = vsel %vm1780, %v1761, %v1005
        %v1795 = vsel %vm1780, %v1762, %v1007
        %v1796 = vsel %vm1780, %v1763, %v1009
        %v1797 = vsel %vm1780, %v1764, %v1011
        %v1798 = vsel %vm1780, %v1765, %v1013
        %v1799 = vsel %vm1780, %v1766, %v1015
        %v1800 = vsel %vm1780, %v1767, %v1017
        %v1801 = vsel %vm1780, %v1768, %v1019
        %v1802 = vsel %vm1780, %v1769, %v1021
        %v1803 = vsel %vm1780, %v1770, %v1023
        %v1804 = vsel %vm1780, %v1771, %v1025
        %v1805 = vsel %vm1780, %v1772, %v1027
        %v1806 = vsel %vm1780, %v1773, %v1029
        %v1807 = vsel %vm1780, %v1774, %v1031
        %v1808 = vsel %vm1780, %v1775, %v1033
        %v1809 = vsel %vm1780, %v1776, %v1035
        %v1810 = vsel %vm1780, %v1777, %v1037
        %v1811 = vsel %vm1780, %v1778, %v1039
        %v1812 = vsel %vm1780, %v1779, %v1041
        %vm1813 = vcmask 130048
        %v1814 = vsel %vm1813, %v1781, %v1107
        %v1815 = vsel %vm1813, %v1782, %v1109
        %v1816 = vsel %vm1813, %v1783, %v1111
        %v1817 = vsel %vm1813, %v1784, %v1113
        %v1818 = vsel %vm1813, %v1785, %v1115
        %v1819 = vsel %vm1813, %v1786, %v1117
        %v1820 = vsel %vm1813, %v1787, %v1119
        %v1821 = vsel %vm1813, %v1788, %v1121
        %v1822 = vsel %vm1813, %v1789, %v1123
        %v1823 = vsel %vm1813, %v1790, %v1125
        %v1824 = vsel %vm1813, %v1791, %v1127
        %v1825 = vsel %vm1813, %v1792, %v1129
        %v1826 = vsel %vm1813, %v1793, %v1131
        %v1827 = vsel %vm1813, %v1794, %v1133
        %v1828 = vsel %vm1813, %v1795, %v1135
        %v1829 = vsel %vm1813, %v1796, %v1137
        %v1830 = vsel %vm1813, %v1797, %v1139
        %v1831 = vsel %vm1813, %v1798, %v1141
        %v1832 = vsel %vm1813, %v1799, %v1143
        %v1833 = vsel %vm1813, %v1800, %v1145
        %v1834 = vsel %vm1813, %v1801, %v1147
        %v1835 = vsel %vm1813, %v1802, %v1149
        %v1836 = vsel %vm1813, %v1803, %v1151
        %v1837 = vsel %vm1813, %v1804, %v1153
        %v1838 = vsel %vm1813, %v1805, %v1155
        %v1839 = vsel %vm1813, %v1806, %v1157
        %v1840 = vsel %vm1813, %v1807, %v1159
        %v1841 = vsel %vm1813, %v1808, %v1161
        %v1842 = vsel %vm1813, %v1809, %v1163
        %v1843 = vsel %vm1813, %v1810, %v1165
        %v1844 = vsel %vm1813, %v1811, %v1167
        %v1845 = vsel %vm1813, %v1812, %v1169
        %vm1846 = vcmask 162816
        %v1847 = vsel %vm1846, %v1814, %v1235
        %v1848 = vsel %vm1846, %v1815, %v1237
        %v1849 = vsel %vm1846, %v1816, %v1239
        %v1850 = vsel %vm1846, %v1817, %v1241
        %v1851 = vsel %vm1846, %v1818, %v1243
        %v1852 = vsel %vm1846, %v1819, %v1245
        %v1853 = vsel %vm1846, %v1820, %v1247
        %v1854 = vsel %vm1846, %v1821, %v1249
        %v1855 = vsel %vm1846, %v1822, %v1251
        %v1856 = vsel %vm1846, %v1823, %v1253
        %v1857 = vsel %vm1846, %v1824, %v1255
        %v1858 = vsel %vm1846, %v1825, %v1257
        %v1859 = vsel %vm1846, %v1826, %v1259
        %v1860 = vsel %vm1846, %v1827, %v1261
        %v1861 = vsel %vm1846, %v1828, %v1263
        %v1862 = vsel %vm1846, %v1829, %v1265
        %v1863 = vsel %vm1846, %v1830, %v1267
        %v1864 = vsel %vm1846, %v1831, %v1269
        %v1865 = vsel %vm1846, %v1832, %v1271
        %v1866 = vsel %vm1846, %v1833, %v1273
        %v1867 = vsel %vm1846, %v1834, %v1275
        %v1868 = vsel %vm1846, %v1835, %v1277
        %v1869 = vsel %vm1846, %v1836, %v1279
        %v1870 = vsel %vm1846, %v1837, %v1281
        %v1871 = vsel %vm1846, %v1838, %v1283
        %v1872 = vsel %vm1846, %v1839, %v1285
        %v1873 = vsel %vm1846, %v1840, %v1287
        %v1874 = vsel %vm1846, %v1841, %v1289
        %v1875 = vsel %vm1846, %v1842, %v1291
        %v1876 = vsel %vm1846, %v1843, %v1293
        %v1877 = vsel %vm1846, %v1844, %v1295
        %v1878 = vsel %vm1846, %v1845, %v1297
        %vm1879 = vcmask 195584
        %v1880 = vsel %vm1879, %v1847, %v1363
        %v1881 = vsel %vm1879, %v1848, %v1365
        %v1882 = vsel %vm1879, %v1849, %v1367
        %v1883 = vsel %vm1879, %v1850, %v1369
        %v1884 = vsel %vm1879, %v1851, %v1371
        %v1885 = vsel %vm1879, %v1852, %v1373
        %v1886 = vsel %vm1879, %v1853, %v1375
        %v1887 = vsel %vm1879, %v1854, %v1377
        %v1888 = vsel %vm1879, %v1855, %v1379
        %v1889 = vsel %vm1879, %v1856, %v1381
        %v1890 = vsel %vm1879, %v1857, %v1383
        %v1891 = vsel %vm1879, %v1858, %v1385
        %v1892 = vsel %vm1879, %v1859, %v1387
        %v1893 = vsel %vm1879, %v1860, %v1389
        %v1894 = vsel %vm1879, %v1861, %v1391
        %v1895 = vsel %vm1879, %v1862, %v1393
        %v1896 = vsel %vm1879, %v1863, %v1395
        %v1897 = vsel %vm1879, %v1864, %v1397
        %v1898 = vsel %vm1879, %v1865, %v1399
        %v1899 = vsel %vm1879, %v1866, %v1401
        %v1900 = vsel %vm1879, %v1867, %v1403
        %v1901 = vsel %vm1879, %v1868, %v1405
        %v1902 = vsel %vm1879, %v1869, %v1407
        %v1903 = vsel %vm1879, %v1870, %v1409
        %v1904 = vsel %vm1879, %v1871, %v1411
        %v1905 = vsel %vm1879, %v1872, %v1413
        %v1906 = vsel %vm1879, %v1873, %v1415
        %v1907 = vsel %vm1879, %v1874, %v1417
        %v1908 = vsel %vm1879, %v1875, %v1419
        %v1909 = vsel %vm1879, %v1876, %v1421
        %v1910 = vsel %vm1879, %v1877, %v1423
        %v1911 = vsel %vm1879, %v1878, %v1425
        %vm1912 = vcmask 228352
        %v1913 = vsel %vm1912, %v1880, %v1491
        %v1914 = vsel %vm1912, %v1881, %v1493
        %v1915 = vsel %vm1912, %v1882, %v1495
        %v1916 = vsel %vm1912, %v1883, %v1497
        %v1917 = vsel %vm1912, %v1884, %v1499
        %v1918 = vsel %vm1912, %v1885, %v1501
        %v1919 = vsel %vm1912, %v1886, %v1503
        %v1920 = vsel %vm1912, %v1887, %v1505
        %v1921 = vsel %vm1912, %v1888, %v1507
        %v1922 = vsel %vm1912, %v1889, %v1509
        %v1923 = vsel %vm1912, %v1890, %v1511
        %v1924 = vsel %vm1912, %v1891, %v1513
        %v1925 = vsel %vm1912, %v1892, %v1515
        %v1926 = vsel %vm1912, %v1893, %v1517
        %v1927 = vsel %vm1912, %v1894, %v1519
        %v1928 = vsel %vm1912, %v1895, %v1521
        %v1929 = vsel %vm1912, %v1896, %v1523
        %v1930 = vsel %vm1912, %v1897, %v1525
        %v1931 = vsel %vm1912, %v1898, %v1527
        %v1932 = vsel %vm1912, %v1899, %v1529
        %v1933 = vsel %vm1912, %v1900, %v1531
        %v1934 = vsel %vm1912, %v1901, %v1533
        %v1935 = vsel %vm1912, %v1902, %v1535
        %v1936 = vsel %vm1912, %v1903, %v1537
        %v1937 = vsel %vm1912, %v1904, %v1539
        %v1938 = vsel %vm1912, %v1905, %v1541
        %v1939 = vsel %vm1912, %v1906, %v1543
        %v1940 = vsel %vm1912, %v1907, %v1545
        %v1941 = vsel %vm1912, %v1908, %v1547
        %v1942 = vsel %vm1912, %v1909, %v1549
        %v1943 = vsel %vm1912, %v1910, %v1551
        %v1944 = vsel %vm1912, %v1911, %v1553
        %vm1945 = vcmask 261120
        %v1946 = vsel %vm1945, %v1913, %v1619
        %v1947 = vsel %vm1945, %v1914, %v1621
        %v1948 = vsel %vm1945, %v1915, %v1623
        %v1949 = vsel %vm1945, %v1916, %v1625
        %v1950 = vsel %vm1945, %v1917, %v1627
        %v1951 = vsel %vm1945, %v1918, %v1629
        %v1952 = vsel %vm1945, %v1919, %v1631
        %v1953 = vsel %vm1945, %v1920, %v1633
        %v1954 = vsel %vm1945, %v1921, %v1635
        %v1955 = vsel %vm1945, %v1922, %v1637
        %v1956 = vsel %vm1945, %v1923, %v1639
        %v1957 = vsel %vm1945, %v1924, %v1641
        %v1958 = vsel %vm1945, %v1925, %v1643
        %v1959 = vsel %vm1945, %v1926, %v1645
        %v1960 = vsel %vm1945, %v1927, %v1647
        %v1961 = vsel %vm1945, %v1928, %v1649
        %v1962 = vsel %vm1945, %v1929, %v1651
        %v1963 = vsel %vm1945, %v1930, %v1653
        %v1964 = vsel %vm1945, %v1931, %v1655
        %v1965 = vsel %vm1945, %v1932, %v1657
        %v1966 = vsel %vm1945, %v1933, %v1659
        %v1967 = vsel %vm1945, %v1934, %v1661
        %v1968 = vsel %vm1945, %v1935, %v1663
        %v1969 = vsel %vm1945, %v1936, %v1665
        %v1970 = vsel %vm1945, %v1937, %v1667
        %v1971 = vsel %vm1945, %v1938, %v1669
        %v1972 = vsel %vm1945, %v1939, %v1671
        %v1973 = vsel %vm1945, %v1940, %v1673
        %v1974 = vsel %vm1945, %v1941, %v1675
        %v1975 = vsel %vm1945, %v1942, %v1677
        %v1976 = vsel %vm1945, %v1943, %v1679
        %v1977 = vsel %vm1945, %v1944, %v1681
        %v1978 = vld [vmem:[%s378] sm:$0xff]
        %v1979 = vld [vmem:[%s378 + $0x8] sm:$0xff]
        %v1980 = vld [vmem:[%s378 + $0x10] sm:$0xff]
        %v1981 = vld [vmem:[%s378 + $0x18] sm:$0xff]
        %v1982 = vld [vmem:[%s378 + $0x20] sm:$0xf]
        %v1983 = vld [vmem:[%s381] sm:$0x1]
        %v1985 = vperm.slane %v1983, 0
        %vm1987 = vcmask 293888
        %v1989 = vsel %vm1987, %v1946, 0
        %v1992 = vsel %vm1987, %v1947, 0
        %v1995 = vsel %vm1987, %v1948, 0
        %v1998 = vsel %vm1987, %v1949, 0
        %v2001 = vsel %vm1987, %v1950, 0
        %v2004 = vsel %vm1987, %v1951, 0
        %v2007 = vsel %vm1987, %v1952, 0
        %v2010 = vsel %vm1987, %v1953, 0
        %v2013 = vsel %vm1987, %v1954, 0
        %v2016 = vsel %vm1987, %v1955, 0
        %v2019 = vsel %vm1987, %v1956, 0
        %v2022 = vsel %vm1987, %v1957, 0
        %v2025 = vsel %vm1987, %v1958, 0
        %v2028 = vsel %vm1987, %v1959, 0
        %v2031 = vsel %vm1987, %v1960, 0
        %v2034 = vsel %vm1987, %v1961, 0
        %v2037 = vsel %vm1987, %v1962, 0
        %v2040 = vsel %vm1987, %v1963, 0
        %v2043 = vsel %vm1987, %v1964, 0
        %v2046 = vsel %vm1987, %v1965, 0
        %v2049 = vsel %vm1987, %v1966, 0
        %v2052 = vsel %vm1987, %v1967, 0
        %v2055 = vsel %vm1987, %v1968, 0
        %v2058 = vsel %vm1987, %v1969, 0
        %v2061 = vsel %vm1987, %v1970, 0
        %v2064 = vsel %vm1987, %v1971, 0
        %v2067 = vsel %vm1987, %v1972, 0
        %v2070 = vsel %vm1987, %v1973, 0
        %v2073 = vsel %vm1987, %v1974, 0
        %v2076 = vsel %vm1987, %v1975, 0
        %v2079 = vsel %vm1987, %v1976, 0
        %v2082 = vsel %vm1987, %v1977, 0
        %vm2084 = vcmask 1043456
        %v2086 = vsel %vm2084, %v1982, 0
        %2088 = vmatpush.msra.mxu0 0.0
        %2089 = vmatpush.msra.mxu0 0.0
        %2090 = vmatpush.msra.mxu0 0.0
        %2091 = vmatpush.msra.mxu0 0.0
        %2092 = vmatpush.msra.mxu0 0.0
        %2093 = vmatpush.msra.mxu0 0.0
        %2094 = vmatpush.msra.mxu0 0.0
        %2095 = vmatpush.msra.mxu0 0.0
        %2096 = vmatpush.msra.mxu0 0.0
        %2097 = vmatpush.msra.mxu0 0.0
        %2098 = vmatpush.msra.mxu0 0.0
        %2099 = vmatpush.msra.mxu0 %v2086
        %2100 = vmatpush.msra.mxu0 %v1981
        %2101 = vmatpush.msra.mxu0 %v1980
        %2102 = vmatpush.msra.mxu0 %v1979
        %2103 = vmatpush.msra.mxu0 %v1978
        %2104 = vmatmul.f32.gmra.mxu0 %v1989
        %v2105 = vpop.f32.mrf.mxu0
        %v2106 = vadd.f32 %v1985, %v2105
        %2107 = vmatmul.f32.gmra.mxu0 %v1992
        %v2108 = vpop.f32.mrf.mxu0
        %v2109 = vadd.f32 %v1985, %v2108
        %2110 = vmatmul.f32.gmra.mxu0 %v1995
        %v2111 = vpop.f32.mrf.mxu0
        %v2112 = vadd.f32 %v1985, %v2111
        %2113 = vmatmul.f32.gmra.mxu0 %v1998
        %v2114 = vpop.f32.mrf.mxu0
        %v2115 = vadd.f32 %v1985, %v2114
        %2116 = vmatmul.f32.gmra.mxu0 %v2001
        %v2117 = vpop.f32.mrf.mxu0
        %v2118 = vadd.f32 %v1985, %v2117
        %2119 = vmatmul.f32.gmra.mxu0 %v2004
        %v2120 = vpop.f32.mrf.mxu0
        %v2121 = vadd.f32 %v1985, %v2120
        %2122 = vmatmul.f32.gmra.mxu0 %v2007
        %v2123 = vpop.f32.mrf.mxu0
        %v2124 = vadd.f32 %v1985, %v2123
        %2125 = vmatmul.f32.gmra.mxu0 %v2010
        %v2126 = vpop.f32.mrf.mxu0
        %v2127 = vadd.f32 %v1985, %v2126
        %2128 = vmatmul.f32.gmra.mxu0 %v2013
        %v2129 = vpop.f32.mrf.mxu0
        %v2130 = vadd.f32 %v1985, %v2129
        %2131 = vmatmul.f32.gmra.mxu0 %v2016
        %v2132 = vpop.f32.mrf.mxu0
        %v2133 = vadd.f32 %v1985, %v2132
        %2134 = vmatmul.f32.gmra.mxu0 %v2019
        %v2135 = vpop.f32.mrf.mxu0
        %v2136 = vadd.f32 %v1985, %v2135
        %2137 = vmatmul.f32.gmra.mxu0 %v2022
        %v2138 = vpop.f32.mrf.mxu0
        %v2139 = vadd.f32 %v1985, %v2138
        %2140 = vmatmul.f32.gmra.mxu0 %v2025
        %v2141 = vpop.f32.mrf.mxu0
        %v2142 = vadd.f32 %v1985, %v2141
        %2143 = vmatmul.f32.gmra.mxu0 %v2028
        %v2144 = vpop.f32.mrf.mxu0
        %v2145 = vadd.f32 %v1985, %v2144
        %2146 = vmatmul.f32.gmra.mxu0 %v2031
        %v2147 = vpop.f32.mrf.mxu0
        %v2148 = vadd.f32 %v1985, %v2147
        %2149 = vmatmul.f32.gmra.mxu0 %v2034
        %v2150 = vpop.f32.mrf.mxu0
        %v2151 = vadd.f32 %v1985, %v2150
        %2152 = vmatmul.f32.gmra.mxu0 %v2037
        %v2153 = vpop.f32.mrf.mxu0
        %v2154 = vadd.f32 %v1985, %v2153
        %2155 = vmatmul.f32.gmra.mxu0 %v2040
        %v2156 = vpop.f32.mrf.mxu0
        %v2157 = vadd.f32 %v1985, %v2156
        %2158 = vmatmul.f32.gmra.mxu0 %v2043
        %v2159 = vpop.f32.mrf.mxu0
        %v2160 = vadd.f32 %v1985, %v2159
        %2161 = vmatmul.f32.gmra.mxu0 %v2046
        %v2162 = vpop.f32.mrf.mxu0
        %v2163 = vadd.f32 %v1985, %v2162
        %2164 = vmatmul.f32.gmra.mxu0 %v2049
        %v2165 = vpop.f32.mrf.mxu0
        %v2166 = vadd.f32 %v1985, %v2165
        %2167 = vmatmul.f32.gmra.mxu0 %v2052
        %v2168 = vpop.f32.mrf.mxu0
        %v2169 = vadd.f32 %v1985, %v2168
        %2170 = vmatmul.f32.gmra.mxu0 %v2055
        %v2171 = vpop.f32.mrf.mxu0
        %v2172 = vadd.f32 %v1985, %v2171
        %2173 = vmatmul.f32.gmra.mxu0 %v2058
        %v2174 = vpop.f32.mrf.mxu0
        %v2175 = vadd.f32 %v1985, %v2174
        %2176 = vmatmul.f32.gmra.mxu0 %v2061
        %v2177 = vpop.f32.mrf.mxu0
        %v2178 = vadd.f32 %v1985, %v2177
        %2179 = vmatmul.f32.gmra.mxu0 %v2064
        %v2180 = vpop.f32.mrf.mxu0
        %v2181 = vadd.f32 %v1985, %v2180
        %2182 = vmatmul.f32.gmra.mxu0 %v2067
        %v2183 = vpop.f32.mrf.mxu0
        %v2184 = vadd.f32 %v1985, %v2183
        %2185 = vmatmul.f32.gmra.mxu0 %v2070
        %v2186 = vpop.f32.mrf.mxu0
        %v2187 = vadd.f32 %v1985, %v2186
        %2188 = vmatmul.f32.gmra.mxu0 %v2073
        %v2189 = vpop.f32.mrf.mxu0
        %v2190 = vadd.f32 %v1985, %v2189
        %2191 = vmatmul.f32.gmra.mxu0 %v2076
        %v2192 = vpop.f32.mrf.mxu0
        %v2193 = vadd.f32 %v1985, %v2192
        %2194 = vmatmul.f32.gmra.mxu0 %v2079
        %v2195 = vpop.f32.mrf.mxu0
        %v2196 = vadd.f32 %v1985, %v2195
        %2197 = vmatmul.f32.gmra.mxu0 %v2082
        %v2198 = vpop.f32.mrf.mxu0
        %v2199 = vadd.f32 %v1985, %v2198
        %2200 = vdwg.mxu0
        %v2201 = vadd.f32 %v2106, %v2109
        %v2202 = vadd.f32 %v2201, %v2112
        %v2203 = vadd.f32 %v2202, %v2115
        %v2204 = vadd.f32 %v2203, %v2118
        %v2205 = vadd.f32 %v2204, %v2121
        %v2206 = vadd.f32 %v2205, %v2124
        %v2207 = vadd.f32 %v2206, %v2127
        %v2208 = vadd.f32 %v2207, %v2130
        %v2209 = vadd.f32 %v2208, %v2133
        %v2210 = vadd.f32 %v2209, %v2136
        %v2211 = vadd.f32 %v2210, %v2139
        %v2212 = vadd.f32 %v2211, %v2142
        %v2213 = vadd.f32 %v2212, %v2145
        %v2214 = vadd.f32 %v2213, %v2148
        %v2215 = vadd.f32 %v2214, %v2151
        %v2216 = vadd.f32 %v2215, %v2154
        %v2217 = vadd.f32 %v2216, %v2157
        %v2218 = vadd.f32 %v2217, %v2160
        %v2219 = vadd.f32 %v2218, %v2163
        %v2220 = vadd.f32 %v2219, %v2166
        %v2221 = vadd.f32 %v2220, %v2169
        %v2222 = vadd.f32 %v2221, %v2172
        %v2223 = vadd.f32 %v2222, %v2175
        %v2224 = vadd.f32 %v2223, %v2178
        %v2225 = vadd.f32 %v2224, %v2181
        %v2226 = vadd.f32 %v2225, %v2184
        %v2227 = vadd.f32 %v2226, %v2187
        %v2228 = vadd.f32 %v2227, %v2190
        %v2229 = vadd.f32 %v2228, %v2193
        %v2230 = vadd.f32 %v2229, %v2196
        %v2231 = vadd.f32 %v2230, %v2199
        %v2232 = vrot.slane %v2231, 4
        %v2233 = vadd.f32 %v2231, %v2232
        %v2234 = vrot.slane %v2233, 2
        %v2235 = vadd.f32 %v2233, %v2234
        %v2236 = vrot.slane %v2235, 1
        %v2237 = vadd.f32 %v2235, %v2236
        %v2238 = vmul.f32 %v2106, %v2106
        %v2239 = vmul.f32 %v2109, %v2109
        %v2240 = vmul.f32 %v2112, %v2112
        %v2241 = vmul.f32 %v2115, %v2115
        %v2242 = vmul.f32 %v2118, %v2118
        %v2243 = vmul.f32 %v2121, %v2121
        %v2244 = vmul.f32 %v2124, %v2124
        %v2245 = vmul.f32 %v2127, %v2127
        %v2246 = vmul.f32 %v2130, %v2130
        %v2247 = vmul.f32 %v2133, %v2133
        %v2248 = vmul.f32 %v2136, %v2136
        %v2249 = vmul.f32 %v2139, %v2139
        %v2250 = vmul.f32 %v2142, %v2142
        %v2251 = vmul.f32 %v2145, %v2145
        %v2252 = vmul.f32 %v2148, %v2148
        %v2253 = vmul.f32 %v2151, %v2151
        %v2254 = vmul.f32 %v2154, %v2154
        %v2255 = vmul.f32 %v2157, %v2157
        %v2256 = vmul.f32 %v2160, %v2160
        %v2257 = vmul.f32 %v2163, %v2163
        %v2258 = vmul.f32 %v2166, %v2166
        %v2259 = vmul.f32 %v2169, %v2169
        %v2260 = vmul.f32 %v2172, %v2172
        %v2261 = vmul.f32 %v2175, %v2175
        %v2262 = vmul.f32 %v2178, %v2178
        %v2263 = vmul.f32 %v2181, %v2181
        %v2264 = vmul.f32 %v2184, %v2184
        %v2265 = vmul.f32 %v2187, %v2187
        %v2266 = vmul.f32 %v2190, %v2190
        %v2267 = vmul.f32 %v2193, %v2193
        %v2268 = vmul.f32 %v2196, %v2196
        %v2269 = vmul.f32 %v2199, %v2199
        %v2270 = vadd.f32 %v2238, %v2239
        %v2271 = vadd.f32 %v2270, %v2240
        %v2272 = vadd.f32 %v2271, %v2241
        %v2273 = vadd.f32 %v2272, %v2242
        %v2274 = vadd.f32 %v2273, %v2243
        %v2275 = vadd.f32 %v2274, %v2244
        %v2276 = vadd.f32 %v2275, %v2245
        %v2277 = vadd.f32 %v2276, %v2246
        %v2278 = vadd.f32 %v2277, %v2247
        %v2279 = vadd.f32 %v2278, %v2248
        %v2280 = vadd.f32 %v2279, %v2249
        %v2281 = vadd.f32 %v2280, %v2250
        %v2282 = vadd.f32 %v2281, %v2251
        %v2283 = vadd.f32 %v2282, %v2252
        %v2284 = vadd.f32 %v2283, %v2253
        %v2285 = vadd.f32 %v2284, %v2254
        %v2286 = vadd.f32 %v2285, %v2255
        %v2287 = vadd.f32 %v2286, %v2256
        %v2288 = vadd.f32 %v2287, %v2257
        %v2289 = vadd.f32 %v2288, %v2258
        %v2290 = vadd.f32 %v2289, %v2259
        %v2291 = vadd.f32 %v2290, %v2260
        %v2292 = vadd.f32 %v2291, %v2261
        %v2293 = vadd.f32 %v2292, %v2262
        %v2294 = vadd.f32 %v2293, %v2263
        %v2295 = vadd.f32 %v2294, %v2264
        %v2296 = vadd.f32 %v2295, %v2265
        %v2297 = vadd.f32 %v2296, %v2266
        %v2298 = vadd.f32 %v2297, %v2267
        %v2299 = vadd.f32 %v2298, %v2268
        %v2300 = vadd.f32 %v2299, %v2269
        %v2301 = vrot.slane %v2300, 4
        %v2302 = vadd.f32 %v2300, %v2301
        %v2303 = vrot.slane %v2302, 2
        %v2304 = vadd.f32 %v2302, %v2303
        %v2305 = vrot.slane %v2304, 1
        %v2306 = vadd.f32 %v2304, %v2305
        %v2307 = vmul.f32 %v2237, 0.00390625
        %v2308 = vmul.f32 %v2306, 0.00390625
        %v2309 = vmul.f32 %v2307, %v2307
        %v2310 = vsub.f32 %v2308, %v2309
        %v2311 = vadd.f32 %v2310, 1e-05
        %v2312 = vrsqrt.pop %v2311
        %v2313 = vmul.f32 %v2312, %v2311
        %v2314 = vmul.f32 %v2313, %v2312
        %v2315 = vmul.f32 0.5, %v2314
        %v2316 = vsub.f32 1.5, %v2315
        %v2317 = vmul.f32 %v2312, %v2316
        %vm2318 = vweird.f32 %v2311
        %vm2319 = vweird.f32 %v2312
        %vm2320 = vmor %vm2318, %vm2319
        %v2321 = vsel %vm2320, %v2312, %v2317
        %v2322 = vsub.f32 %v2106, %v2307
        %v2323 = vsub.f32 %v2109, %v2307
        %v2324 = vsub.f32 %v2112, %v2307
        %v2325 = vsub.f32 %v2115, %v2307
        %v2326 = vsub.f32 %v2118, %v2307
        %v2327 = vsub.f32 %v2121, %v2307
        %v2328 = vsub.f32 %v2124, %v2307
        %v2329 = vsub.f32 %v2127, %v2307
        %v2330 = vsub.f32 %v2130, %v2307
        %v2331 = vsub.f32 %v2133, %v2307
        %v2332 = vsub.f32 %v2136, %v2307
        %v2333 = vsub.f32 %v2139, %v2307
        %v2334 = vsub.f32 %v2142, %v2307
        %v2335 = vsub.f32 %v2145, %v2307
        %v2336 = vsub.f32 %v2148, %v2307
        %v2337 = vsub.f32 %v2151, %v2307
        %v2338 = vsub.f32 %v2154, %v2307
        %v2339 = vsub.f32 %v2157, %v2307
        %v2340 = vsub.f32 %v2160, %v2307
        %v2341 = vsub.f32 %v2163, %v2307
        %v2342 = vsub.f32 %v2166, %v2307
        %v2343 = vsub.f32 %v2169, %v2307
        %v2344 = vsub.f32 %v2172, %v2307
        %v2345 = vsub.f32 %v2175, %v2307
        %v2346 = vsub.f32 %v2178, %v2307
        %v2347 = vsub.f32 %v2181, %v2307
        %v2348 = vsub.f32 %v2184, %v2307
        %v2349 = vsub.f32 %v2187, %v2307
        %v2350 = vsub.f32 %v2190, %v2307
        %v2351 = vsub.f32 %v2193, %v2307
        %v2352 = vsub.f32 %v2196, %v2307
        %v2353 = vsub.f32 %v2199, %v2307
        %v2354 = vld [vmem:[%s384] sm:$0x1]
        %v2355 = vmul.f32 %v2321, %v2354
        %v2356 = vperm.slane %v2355, 0
        %v2357 = vmul.f32 %v2322, %v2356
        %v2358 = vmul.f32 %v2323, %v2356
        %v2359 = vmul.f32 %v2324, %v2356
        %v2360 = vmul.f32 %v2325, %v2356
        %v2361 = vmul.f32 %v2326, %v2356
        %v2362 = vmul.f32 %v2327, %v2356
        %v2363 = vmul.f32 %v2328, %v2356
        %v2364 = vmul.f32 %v2329, %v2356
        %v2365 = vmul.f32 %v2330, %v2356
        %v2366 = vmul.f32 %v2331, %v2356
        %v2367 = vmul.f32 %v2332, %v2356
        %v2368 = vmul.f32 %v2333, %v2356
        %v2369 = vmul.f32 %v2334, %v2356
        %v2370 = vmul.f32 %v2335, %v2356
        %v2371 = vmul.f32 %v2336, %v2356
        %v2372 = vmul.f32 %v2337, %v2356
        %v2373 = vmul.f32 %v2338, %v2356
        %v2374 = vmul.f32 %v2339, %v2356
        %v2375 = vmul.f32 %v2340, %v2356
        %v2376 = vmul.f32 %v2341, %v2356
        %v2377 = vmul.f32 %v2342, %v2356
        %v2378 = vmul.f32 %v2343, %v2356
        %v2379 = vmul.f32 %v2344, %v2356
        %v2380 = vmul.f32 %v2345, %v2356
        %v2381 = vmul.f32 %v2346, %v2356
        %v2382 = vmul.f32 %v2347, %v2356
        %v2383 = vmul.f32 %v2348, %v2356
        %v2384 = vmul.f32 %v2349, %v2356
        %v2385 = vmul.f32 %v2350, %v2356
        %v2386 = vmul.f32 %v2351, %v2356
        %v2387 = vmul.f32 %v2352, %v2356
        %v2388 = vmul.f32 %v2353, %v2356
        %v2389 = vld [vmem:[%s387] sm:$0x1]
        %v2391 = vperm.slane %v2389, 0
        %v2393 = vadd.f32 %v2357, %v2391
        %v2394 = vadd.f32 %v2358, %v2391
        %v2395 = vadd.f32 %v2359, %v2391
        %v2396 = vadd.f32 %v2360, %v2391
        %v2397 = vadd.f32 %v2361, %v2391
        %v2398 = vadd.f32 %v2362, %v2391
        %v2399 = vadd.f32 %v2363, %v2391
        %v2400 = vadd.f32 %v2364, %v2391
        %v2401 = vadd.f32 %v2365, %v2391
        %v2402 = vadd.f32 %v2366, %v2391
        %v2403 = vadd.f32 %v2367, %v2391
        %v2404 = vadd.f32 %v2368, %v2391
        %v2405 = vadd.f32 %v2369, %v2391
        %v2406 = vadd.f32 %v2370, %v2391
        %v2407 = vadd.f32 %v2371, %v2391
        %v2408 = vadd.f32 %v2372, %v2391
        %v2409 = vadd.f32 %v2373, %v2391
        %v2410 = vadd.f32 %v2374, %v2391
        %v2411 = vadd.f32 %v2375, %v2391
        %v2412 = vadd.f32 %v2376, %v2391
        %v2413 = vadd.f32 %v2377, %v2391
        %v2414 = vadd.f32 %v2378, %v2391
        %v2415 = vadd.f32 %v2379, %v2391
        %v2416 = vadd.f32 %v2380, %v2391
        %v2417 = vadd.f32 %v2381, %v2391
        %v2418 = vadd.f32 %v2382, %v2391
        %v2419 = vadd.f32 %v2383, %v2391
        %v2420 = vadd.f32 %v2384, %v2391
        %v2421 = vadd.f32 %v2385, %v2391
        %v2422 = vadd.f32 %v2386, %v2391
        %v2423 = vadd.f32 %v2387, %v2391
        %v2424 = vadd.f32 %v2388, %v2391
        %v2425 = vld [vmem:[%s393] sm:$0x1]
        %v2426 = vadd.f32 %v2425, 1.0
        %v2428 = vperm.slane %v2426, 0
        %v2430 = vmul.f32 %v2393, %v2428
        %v2431 = vmul.f32 %v2394, %v2428
        %v2432 = vmul.f32 %v2395, %v2428
        %v2433 = vmul.f32 %v2396, %v2428
        %v2434 = vmul.f32 %v2397, %v2428
        %v2435 = vmul.f32 %v2398, %v2428
        %v2436 = vmul.f32 %v2399, %v2428
        %v2437 = vmul.f32 %v2400, %v2428
        %v2438 = vmul.f32 %v2401, %v2428
        %v2439 = vmul.f32 %v2402, %v2428
        %v2440 = vmul.f32 %v2403, %v2428
        %v2441 = vmul.f32 %v2404, %v2428
        %v2442 = vmul.f32 %v2405, %v2428
        %v2443 = vmul.f32 %v2406, %v2428
        %v2444 = vmul.f32 %v2407, %v2428
        %v2445 = vmul.f32 %v2408, %v2428
        %v2446 = vmul.f32 %v2409, %v2428
        %v2447 = vmul.f32 %v2410, %v2428
        %v2448 = vmul.f32 %v2411, %v2428
        %v2449 = vmul.f32 %v2412, %v2428
        %v2450 = vmul.f32 %v2413, %v2428
        %v2451 = vmul.f32 %v2414, %v2428
        %v2452 = vmul.f32 %v2415, %v2428
        %v2453 = vmul.f32 %v2416, %v2428
        %v2454 = vmul.f32 %v2417, %v2428
        %v2455 = vmul.f32 %v2418, %v2428
        %v2456 = vmul.f32 %v2419, %v2428
        %v2457 = vmul.f32 %v2420, %v2428
        %v2458 = vmul.f32 %v2421, %v2428
        %v2459 = vmul.f32 %v2422, %v2428
        %v2460 = vmul.f32 %v2423, %v2428
        %v2461 = vmul.f32 %v2424, %v2428
        %v2462 = vld [vmem:[%s399] sm:$0x1]
        %v2464 = vperm.slane %v2462, 0
        %v2466 = vadd.f32 %v2430, %v2464
        %v2467 = vadd.f32 %v2431, %v2464
        %v2468 = vadd.f32 %v2432, %v2464
        %v2469 = vadd.f32 %v2433, %v2464
        %v2470 = vadd.f32 %v2434, %v2464
        %v2471 = vadd.f32 %v2435, %v2464
        %v2472 = vadd.f32 %v2436, %v2464
        %v2473 = vadd.f32 %v2437, %v2464
        %v2474 = vadd.f32 %v2438, %v2464
        %v2475 = vadd.f32 %v2439, %v2464
        %v2476 = vadd.f32 %v2440, %v2464
        %v2477 = vadd.f32 %v2441, %v2464
        %v2478 = vadd.f32 %v2442, %v2464
        %v2479 = vadd.f32 %v2443, %v2464
        %v2480 = vadd.f32 %v2444, %v2464
        %v2481 = vadd.f32 %v2445, %v2464
        %v2482 = vadd.f32 %v2446, %v2464
        %v2483 = vadd.f32 %v2447, %v2464
        %v2484 = vadd.f32 %v2448, %v2464
        %v2485 = vadd.f32 %v2449, %v2464
        %v2486 = vadd.f32 %v2450, %v2464
        %v2487 = vadd.f32 %v2451, %v2464
        %v2488 = vadd.f32 %v2452, %v2464
        %v2489 = vadd.f32 %v2453, %v2464
        %v2490 = vadd.f32 %v2454, %v2464
        %v2491 = vadd.f32 %v2455, %v2464
        %v2492 = vadd.f32 %v2456, %v2464
        %v2493 = vadd.f32 %v2457, %v2464
        %v2494 = vadd.f32 %v2458, %v2464
        %v2495 = vadd.f32 %v2459, %v2464
        %v2496 = vadd.f32 %v2460, %v2464
        %v2497 = vadd.f32 %v2461, %v2464
        %v2498 = vxor.u32 %v2466, 2147483648
        %v2499 = vxor.u32 %v2467, 2147483648
        %v2500 = vxor.u32 %v2468, 2147483648
        %v2501 = vxor.u32 %v2469, 2147483648
        %v2502 = vxor.u32 %v2470, 2147483648
        %v2503 = vxor.u32 %v2471, 2147483648
        %v2504 = vxor.u32 %v2472, 2147483648
        %v2505 = vxor.u32 %v2473, 2147483648
        %v2506 = vxor.u32 %v2474, 2147483648
        %v2507 = vxor.u32 %v2475, 2147483648
        %v2508 = vxor.u32 %v2476, 2147483648
        %v2509 = vxor.u32 %v2477, 2147483648
        %v2510 = vxor.u32 %v2478, 2147483648
        %v2511 = vxor.u32 %v2479, 2147483648
        %v2512 = vxor.u32 %v2480, 2147483648
        %v2513 = vxor.u32 %v2481, 2147483648
        %v2514 = vxor.u32 %v2482, 2147483648
        %v2515 = vxor.u32 %v2483, 2147483648
        %v2516 = vxor.u32 %v2484, 2147483648
        %v2517 = vxor.u32 %v2485, 2147483648
        %v2518 = vxor.u32 %v2486, 2147483648
        %v2519 = vxor.u32 %v2487, 2147483648
        %v2520 = vxor.u32 %v2488, 2147483648
        %v2521 = vxor.u32 %v2489, 2147483648
        %v2522 = vxor.u32 %v2490, 2147483648
        %v2523 = vxor.u32 %v2491, 2147483648
        %v2524 = vxor.u32 %v2492, 2147483648
        %v2525 = vxor.u32 %v2493, 2147483648
        %v2526 = vxor.u32 %v2494, 2147483648
        %v2527 = vxor.u32 %v2495, 2147483648
        %v2528 = vxor.u32 %v2496, 2147483648
        %v2529 = vxor.u32 %v2497, 2147483648
        %v2530 = vmul.f32 %v2498, 1.442695
        %v2531 = vpow.pop %v2530
        %v2532 = vmul.f32 %v2499, 1.442695
        %v2533 = vpow.pop %v2532
        %v2534 = vmul.f32 %v2500, 1.442695
        %v2535 = vpow.pop %v2534
        %v2536 = vmul.f32 %v2501, 1.442695
        %v2537 = vpow.pop %v2536
        %v2538 = vmul.f32 %v2502, 1.442695
        %v2539 = vpow.pop %v2538
        %v2540 = vmul.f32 %v2503, 1.442695
        %v2541 = vpow.pop %v2540
        %v2542 = vmul.f32 %v2504, 1.442695
        %v2543 = vpow.pop %v2542
        %v2544 = vmul.f32 %v2505, 1.442695
        %v2545 = vpow.pop %v2544
        %v2546 = vmul.f32 %v2506, 1.442695
        %v2547 = vpow.pop %v2546
        %v2548 = vmul.f32 %v2507, 1.442695
        %v2549 = vpow.pop %v2548
        %v2550 = vmul.f32 %v2508, 1.442695
        %v2551 = vpow.pop %v2550
        %v2552 = vmul.f32 %v2509, 1.442695
        %v2553 = vpow.pop %v2552
        %v2554 = vmul.f32 %v2510, 1.442695
        %v2555 = vpow.pop %v2554
        %v2556 = vmul.f32 %v2511, 1.442695
        %v2557 = vpow.pop %v2556
        %v2558 = vmul.f32 %v2512, 1.442695
        %v2559 = vpow.pop %v2558
        %v2560 = vmul.f32 %v2513, 1.442695
        %v2561 = vpow.pop %v2560
        %v2562 = vmul.f32 %v2514, 1.442695
        %v2563 = vpow.pop %v2562
        %v2564 = vmul.f32 %v2515, 1.442695
        %v2565 = vpow.pop %v2564
        %v2566 = vmul.f32 %v2516, 1.442695
        %v2567 = vpow.pop %v2566
        %v2568 = vmul.f32 %v2517, 1.442695
        %v2569 = vpow.pop %v2568
        %v2570 = vmul.f32 %v2518, 1.442695
        %v2571 = vpow.pop %v2570
        %v2572 = vmul.f32 %v2519, 1.442695
        %v2573 = vpow.pop %v2572
        %v2574 = vmul.f32 %v2520, 1.442695
        %v2575 = vpow.pop %v2574
        %v2576 = vmul.f32 %v2521, 1.442695
        %v2577 = vpow.pop %v2576
        %v2578 = vmul.f32 %v2522, 1.442695
        %v2579 = vpow.pop %v2578
        %v2580 = vmul.f32 %v2523, 1.442695
        %v2581 = vpow.pop %v2580
        %v2582 = vmul.f32 %v2524, 1.442695
        %v2583 = vpow.pop %v2582
        %v2584 = vmul.f32 %v2525, 1.442695
        %v2585 = vpow.pop %v2584
        %v2586 = vmul.f32 %v2526, 1.442695
        %v2587 = vpow.pop %v2586
        %v2588 = vmul.f32 %v2527, 1.442695
        %v2589 = vpow.pop %v2588
        %v2590 = vmul.f32 %v2528, 1.442695
        %v2591 = vpow.pop %v2590
        %v2592 = vmul.f32 %v2529, 1.442695
        %v2593 = vpow.pop %v2592
        %v2594 = vadd.f32 %v2531, 1.0
        %v2595 = vadd.f32 %v2533, 1.0
        %v2596 = vadd.f32 %v2535, 1.0
        %v2597 = vadd.f32 %v2537, 1.0
        %v2598 = vadd.f32 %v2539, 1.0
        %v2599 = vadd.f32 %v2541, 1.0
        %v2600 = vadd.f32 %v2543, 1.0
        %v2601 = vadd.f32 %v2545, 1.0
        %v2602 = vadd.f32 %v2547, 1.0
        %v2603 = vadd.f32 %v2549, 1.0
        %v2604 = vadd.f32 %v2551, 1.0
        %v2605 = vadd.f32 %v2553, 1.0
        %v2606 = vadd.f32 %v2555, 1.0
        %v2607 = vadd.f32 %v2557, 1.0
        %v2608 = vadd.f32 %v2559, 1.0
        %v2609 = vadd.f32 %v2561, 1.0
        %v2610 = vadd.f32 %v2563, 1.0
        %v2611 = vadd.f32 %v2565, 1.0
        %v2612 = vadd.f32 %v2567, 1.0
        %v2613 = vadd.f32 %v2569, 1.0
        %v2614 = vadd.f32 %v2571, 1.0
        %v2615 = vadd.f32 %v2573, 1.0
        %v2616 = vadd.f32 %v2575, 1.0
        %v2617 = vadd.f32 %v2577, 1.0
        %v2618 = vadd.f32 %v2579, 1.0
        %v2619 = vadd.f32 %v2581, 1.0
        %v2620 = vadd.f32 %v2583, 1.0
        %v2621 = vadd.f32 %v2585, 1.0
        %v2622 = vadd.f32 %v2587, 1.0
        %v2623 = vadd.f32 %v2589, 1.0
        %v2624 = vadd.f32 %v2591, 1.0
        %v2625 = vadd.f32 %v2593, 1.0
        %v2626 = vrcp.pop %v2594
        %v2627 = vmul.f32 %v2594, %v2626
        %v2628 = vsub.f32 1.0, %v2627
        %v2629 = vmul.f32 %v2626, %v2628
        %v2630 = vadd.f32 %v2626, %v2629
        %vm2631 = vweird.f32 %v2594
        %vm2632 = vweird.f32 %v2626
        %vm2633 = vmor %vm2631, %vm2632
        %v2634 = vsel %vm2633, %v2626, %v2630
        %v2635 = vand.u32 2147483647, %v2594
        %vm2636 = vcmp.eq.f32.partialorder %v2635, 8.507059e+37
        %v2637 = vand.u32 %v2594, 2147483648
        %v2638 = vor.u32 1.1754944e-38, %v2637
        %v2639 = vsel %vm2636, %v2638, %v2634
        %v2640 = vmul.f32 1.0, %v2639
        %v2641 = vrcp.pop %v2595
        %v2642 = vmul.f32 %v2595, %v2641
        %v2643 = vsub.f32 1.0, %v2642
        %v2644 = vmul.f32 %v2641, %v2643
        %v2645 = vadd.f32 %v2641, %v2644
        %vm2646 = vweird.f32 %v2595
        %vm2647 = vweird.f32 %v2641
        %vm2648 = vmor %vm2646, %vm2647
        %v2649 = vsel %vm2648, %v2641, %v2645
        %v2650 = vand.u32 2147483647, %v2595
        %vm2651 = vcmp.eq.f32.partialorder %v2650, 8.507059e+37
        %v2652 = vand.u32 %v2595, 2147483648
        %v2653 = vor.u32 1.1754944e-38, %v2652
        %v2654 = vsel %vm2651, %v2653, %v2649
        %v2655 = vmul.f32 1.0, %v2654
        %v2656 = vrcp.pop %v2596
        %v2657 = vmul.f32 %v2596, %v2656
        %v2658 = vsub.f32 1.0, %v2657
        %v2659 = vmul.f32 %v2656, %v2658
        %v2660 = vadd.f32 %v2656, %v2659
        %vm2661 = vweird.f32 %v2596
        %vm2662 = vweird.f32 %v2656
        %vm2663 = vmor %vm2661, %vm2662
        %v2664 = vsel %vm2663, %v2656, %v2660
        %v2665 = vand.u32 2147483647, %v2596
        %vm2666 = vcmp.eq.f32.partialorder %v2665, 8.507059e+37
        %v2667 = vand.u32 %v2596, 2147483648
        %v2668 = vor.u32 1.1754944e-38, %v2667
        %v2669 = vsel %vm2666, %v2668, %v2664
        %v2670 = vmul.f32 1.0, %v2669
        %v2671 = vrcp.pop %v2597
        %v2672 = vmul.f32 %v2597, %v2671
        %v2673 = vsub.f32 1.0, %v2672
        %v2674 = vmul.f32 %v2671, %v2673
        %v2675 = vadd.f32 %v2671, %v2674
        %vm2676 = vweird.f32 %v2597
        %vm2677 = vweird.f32 %v2671
        %vm2678 = vmor %vm2676, %vm2677
        %v2679 = vsel %vm2678, %v2671, %v2675
        %v2680 = vand.u32 2147483647, %v2597
        %vm2681 = vcmp.eq.f32.partialorder %v2680, 8.507059e+37
        %v2682 = vand.u32 %v2597, 2147483648
        %v2683 = vor.u32 1.1754944e-38, %v2682
        %v2684 = vsel %vm2681, %v2683, %v2679
        %v2685 = vmul.f32 1.0, %v2684
        %v2686 = vrcp.pop %v2598
        %v2687 = vmul.f32 %v2598, %v2686
        %v2688 = vsub.f32 1.0, %v2687
        %v2689 = vmul.f32 %v2686, %v2688
        %v2690 = vadd.f32 %v2686, %v2689
        %vm2691 = vweird.f32 %v2598
        %vm2692 = vweird.f32 %v2686
        %vm2693 = vmor %vm2691, %vm2692
        %v2694 = vsel %vm2693, %v2686, %v2690
        %v2695 = vand.u32 2147483647, %v2598
        %vm2696 = vcmp.eq.f32.partialorder %v2695, 8.507059e+37
        %v2697 = vand.u32 %v2598, 2147483648
        %v2698 = vor.u32 1.1754944e-38, %v2697
        %v2699 = vsel %vm2696, %v2698, %v2694
        %v2700 = vmul.f32 1.0, %v2699
        %v2701 = vrcp.pop %v2599
        %v2702 = vmul.f32 %v2599, %v2701
        %v2703 = vsub.f32 1.0, %v2702
        %v2704 = vmul.f32 %v2701, %v2703
        %v2705 = vadd.f32 %v2701, %v2704
        %vm2706 = vweird.f32 %v2599
        %vm2707 = vweird.f32 %v2701
        %vm2708 = vmor %vm2706, %vm2707
        %v2709 = vsel %vm2708, %v2701, %v2705
        %v2710 = vand.u32 2147483647, %v2599
        %vm2711 = vcmp.eq.f32.partialorder %v2710, 8.507059e+37
        %v2712 = vand.u32 %v2599, 2147483648
        %v2713 = vor.u32 1.1754944e-38, %v2712
        %v2714 = vsel %vm2711, %v2713, %v2709
        %v2715 = vmul.f32 1.0, %v2714
        %v2716 = vrcp.pop %v2600
        %v2717 = vmul.f32 %v2600, %v2716
        %v2718 = vsub.f32 1.0, %v2717
        %v2719 = vmul.f32 %v2716, %v2718
        %v2720 = vadd.f32 %v2716, %v2719
        %vm2721 = vweird.f32 %v2600
        %vm2722 = vweird.f32 %v2716
        %vm2723 = vmor %vm2721, %vm2722
        %v2724 = vsel %vm2723, %v2716, %v2720
        %v2725 = vand.u32 2147483647, %v2600
        %vm2726 = vcmp.eq.f32.partialorder %v2725, 8.507059e+37
        %v2727 = vand.u32 %v2600, 2147483648
        %v2728 = vor.u32 1.1754944e-38, %v2727
        %v2729 = vsel %vm2726, %v2728, %v2724
        %v2730 = vmul.f32 1.0, %v2729
        %v2731 = vrcp.pop %v2601
        %v2732 = vmul.f32 %v2601, %v2731
        %v2733 = vsub.f32 1.0, %v2732
        %v2734 = vmul.f32 %v2731, %v2733
        %v2735 = vadd.f32 %v2731, %v2734
        %vm2736 = vweird.f32 %v2601
        %vm2737 = vweird.f32 %v2731
        %vm2738 = vmor %vm2736, %vm2737
        %v2739 = vsel %vm2738, %v2731, %v2735
        %v2740 = vand.u32 2147483647, %v2601
        %vm2741 = vcmp.eq.f32.partialorder %v2740, 8.507059e+37
        %v2742 = vand.u32 %v2601, 2147483648
        %v2743 = vor.u32 1.1754944e-38, %v2742
        %v2744 = vsel %vm2741, %v2743, %v2739
        %v2745 = vmul.f32 1.0, %v2744
        %v2746 = vrcp.pop %v2602
        %v2747 = vmul.f32 %v2602, %v2746
        %v2748 = vsub.f32 1.0, %v2747
        %v2749 = vmul.f32 %v2746, %v2748
        %v2750 = vadd.f32 %v2746, %v2749
        %vm2751 = vweird.f32 %v2602
        %vm2752 = vweird.f32 %v2746
        %vm2753 = vmor %vm2751, %vm2752
        %v2754 = vsel %vm2753, %v2746, %v2750
        %v2755 = vand.u32 2147483647, %v2602
        %vm2756 = vcmp.eq.f32.partialorder %v2755, 8.507059e+37
        %v2757 = vand.u32 %v2602, 2147483648
        %v2758 = vor.u32 1.1754944e-38, %v2757
        %v2759 = vsel %vm2756, %v2758, %v2754
        %v2760 = vmul.f32 1.0, %v2759
        %v2761 = vrcp.pop %v2603
        %v2762 = vmul.f32 %v2603, %v2761
        %v2763 = vsub.f32 1.0, %v2762
        %v2764 = vmul.f32 %v2761, %v2763
        %v2765 = vadd.f32 %v2761, %v2764
        %vm2766 = vweird.f32 %v2603
        %vm2767 = vweird.f32 %v2761
        %vm2768 = vmor %vm2766, %vm2767
        %v2769 = vsel %vm2768, %v2761, %v2765
        %v2770 = vand.u32 2147483647, %v2603
        %vm2771 = vcmp.eq.f32.partialorder %v2770, 8.507059e+37
        %v2772 = vand.u32 %v2603, 2147483648
        %v2773 = vor.u32 1.1754944e-38, %v2772
        %v2774 = vsel %vm2771, %v2773, %v2769
        %v2775 = vmul.f32 1.0, %v2774
        %v2776 = vrcp.pop %v2604
        %v2777 = vmul.f32 %v2604, %v2776
        %v2778 = vsub.f32 1.0, %v2777
        %v2779 = vmul.f32 %v2776, %v2778
        %v2780 = vadd.f32 %v2776, %v2779
        %vm2781 = vweird.f32 %v2604
        %vm2782 = vweird.f32 %v2776
        %vm2783 = vmor %vm2781, %vm2782
        %v2784 = vsel %vm2783, %v2776, %v2780
        %v2785 = vand.u32 2147483647, %v2604
        %vm2786 = vcmp.eq.f32.partialorder %v2785, 8.507059e+37
        %v2787 = vand.u32 %v2604, 2147483648
        %v2788 = vor.u32 1.1754944e-38, %v2787
        %v2789 = vsel %vm2786, %v2788, %v2784
        %v2790 = vmul.f32 1.0, %v2789
        %v2791 = vrcp.pop %v2605
        %v2792 = vmul.f32 %v2605, %v2791
        %v2793 = vsub.f32 1.0, %v2792
        %v2794 = vmul.f32 %v2791, %v2793
        %v2795 = vadd.f32 %v2791, %v2794
        %vm2796 = vweird.f32 %v2605
        %vm2797 = vweird.f32 %v2791
        %vm2798 = vmor %vm2796, %vm2797
        %v2799 = vsel %vm2798, %v2791, %v2795
        %v2800 = vand.u32 2147483647, %v2605
        %vm2801 = vcmp.eq.f32.partialorder %v2800, 8.507059e+37
        %v2802 = vand.u32 %v2605, 2147483648
        %v2803 = vor.u32 1.1754944e-38, %v2802
        %v2804 = vsel %vm2801, %v2803, %v2799
        %v2805 = vmul.f32 1.0, %v2804
        %v2806 = vrcp.pop %v2606
        %v2807 = vmul.f32 %v2606, %v2806
        %v2808 = vsub.f32 1.0, %v2807
        %v2809 = vmul.f32 %v2806, %v2808
        %v2810 = vadd.f32 %v2806, %v2809
        %vm2811 = vweird.f32 %v2606
        %vm2812 = vweird.f32 %v2806
        %vm2813 = vmor %vm2811, %vm2812
        %v2814 = vsel %vm2813, %v2806, %v2810
        %v2815 = vand.u32 2147483647, %v2606
        %vm2816 = vcmp.eq.f32.partialorder %v2815, 8.507059e+37
        %v2817 = vand.u32 %v2606, 2147483648
        %v2818 = vor.u32 1.1754944e-38, %v2817
        %v2819 = vsel %vm2816, %v2818, %v2814
        %v2820 = vmul.f32 1.0, %v2819
        %v2821 = vrcp.pop %v2607
        %v2822 = vmul.f32 %v2607, %v2821
        %v2823 = vsub.f32 1.0, %v2822
        %v2824 = vmul.f32 %v2821, %v2823
        %v2825 = vadd.f32 %v2821, %v2824
        %vm2826 = vweird.f32 %v2607
        %vm2827 = vweird.f32 %v2821
        %vm2828 = vmor %vm2826, %vm2827
        %v2829 = vsel %vm2828, %v2821, %v2825
        %v2830 = vand.u32 2147483647, %v2607
        %vm2831 = vcmp.eq.f32.partialorder %v2830, 8.507059e+37
        %v2832 = vand.u32 %v2607, 2147483648
        %v2833 = vor.u32 1.1754944e-38, %v2832
        %v2834 = vsel %vm2831, %v2833, %v2829
        %v2835 = vmul.f32 1.0, %v2834
        %v2836 = vrcp.pop %v2608
        %v2837 = vmul.f32 %v2608, %v2836
        %v2838 = vsub.f32 1.0, %v2837
        %v2839 = vmul.f32 %v2836, %v2838
        %v2840 = vadd.f32 %v2836, %v2839
        %vm2841 = vweird.f32 %v2608
        %vm2842 = vweird.f32 %v2836
        %vm2843 = vmor %vm2841, %vm2842
        %v2844 = vsel %vm2843, %v2836, %v2840
        %v2845 = vand.u32 2147483647, %v2608
        %vm2846 = vcmp.eq.f32.partialorder %v2845, 8.507059e+37
        %v2847 = vand.u32 %v2608, 2147483648
        %v2848 = vor.u32 1.1754944e-38, %v2847
        %v2849 = vsel %vm2846, %v2848, %v2844
        %v2850 = vmul.f32 1.0, %v2849
        %v2851 = vrcp.pop %v2609
        %v2852 = vmul.f32 %v2609, %v2851
        %v2853 = vsub.f32 1.0, %v2852
        %v2854 = vmul.f32 %v2851, %v2853
        %v2855 = vadd.f32 %v2851, %v2854
        %vm2856 = vweird.f32 %v2609
        %vm2857 = vweird.f32 %v2851
        %vm2858 = vmor %vm2856, %vm2857
        %v2859 = vsel %vm2858, %v2851, %v2855
        %v2860 = vand.u32 2147483647, %v2609
        %vm2861 = vcmp.eq.f32.partialorder %v2860, 8.507059e+37
        %v2862 = vand.u32 %v2609, 2147483648
        %v2863 = vor.u32 1.1754944e-38, %v2862
        %v2864 = vsel %vm2861, %v2863, %v2859
        %v2865 = vmul.f32 1.0, %v2864
        %v2866 = vrcp.pop %v2610
        %v2867 = vmul.f32 %v2610, %v2866
        %v2868 = vsub.f32 1.0, %v2867
        %v2869 = vmul.f32 %v2866, %v2868
        %v2870 = vadd.f32 %v2866, %v2869
        %vm2871 = vweird.f32 %v2610
        %vm2872 = vweird.f32 %v2866
        %vm2873 = vmor %vm2871, %vm2872
        %v2874 = vsel %vm2873, %v2866, %v2870
        %v2875 = vand.u32 2147483647, %v2610
        %vm2876 = vcmp.eq.f32.partialorder %v2875, 8.507059e+37
        %v2877 = vand.u32 %v2610, 2147483648
        %v2878 = vor.u32 1.1754944e-38, %v2877
        %v2879 = vsel %vm2876, %v2878, %v2874
        %v2880 = vmul.f32 1.0, %v2879
        %v2881 = vrcp.pop %v2611
        %v2882 = vmul.f32 %v2611, %v2881
        %v2883 = vsub.f32 1.0, %v2882
        %v2884 = vmul.f32 %v2881, %v2883
        %v2885 = vadd.f32 %v2881, %v2884
        %vm2886 = vweird.f32 %v2611
        %vm2887 = vweird.f32 %v2881
        %vm2888 = vmor %vm2886, %vm2887
        %v2889 = vsel %vm2888, %v2881, %v2885
        %v2890 = vand.u32 2147483647, %v2611
        %vm2891 = vcmp.eq.f32.partialorder %v2890, 8.507059e+37
        %v2892 = vand.u32 %v2611, 2147483648
        %v2893 = vor.u32 1.1754944e-38, %v2892
        %v2894 = vsel %vm2891, %v2893, %v2889
        %v2895 = vmul.f32 1.0, %v2894
        %v2896 = vrcp.pop %v2612
        %v2897 = vmul.f32 %v2612, %v2896
        %v2898 = vsub.f32 1.0, %v2897
        %v2899 = vmul.f32 %v2896, %v2898
        %v2900 = vadd.f32 %v2896, %v2899
        %vm2901 = vweird.f32 %v2612
        %vm2902 = vweird.f32 %v2896
        %vm2903 = vmor %vm2901, %vm2902
        %v2904 = vsel %vm2903, %v2896, %v2900
        %v2905 = vand.u32 2147483647, %v2612
        %vm2906 = vcmp.eq.f32.partialorder %v2905, 8.507059e+37
        %v2907 = vand.u32 %v2612, 2147483648
        %v2908 = vor.u32 1.1754944e-38, %v2907
        %v2909 = vsel %vm2906, %v2908, %v2904
        %v2910 = vmul.f32 1.0, %v2909
        %v2911 = vrcp.pop %v2613
        %v2912 = vmul.f32 %v2613, %v2911
        %v2913 = vsub.f32 1.0, %v2912
        %v2914 = vmul.f32 %v2911, %v2913
        %v2915 = vadd.f32 %v2911, %v2914
        %vm2916 = vweird.f32 %v2613
        %vm2917 = vweird.f32 %v2911
        %vm2918 = vmor %vm2916, %vm2917
        %v2919 = vsel %vm2918, %v2911, %v2915
        %v2920 = vand.u32 2147483647, %v2613
        %vm2921 = vcmp.eq.f32.partialorder %v2920, 8.507059e+37
        %v2922 = vand.u32 %v2613, 2147483648
        %v2923 = vor.u32 1.1754944e-38, %v2922
        %v2924 = vsel %vm2921, %v2923, %v2919
        %v2925 = vmul.f32 1.0, %v2924
        %v2926 = vrcp.pop %v2614
        %v2927 = vmul.f32 %v2614, %v2926
        %v2928 = vsub.f32 1.0, %v2927
        %v2929 = vmul.f32 %v2926, %v2928
        %v2930 = vadd.f32 %v2926, %v2929
        %vm2931 = vweird.f32 %v2614
        %vm2932 = vweird.f32 %v2926
        %vm2933 = vmor %vm2931, %vm2932
        %v2934 = vsel %vm2933, %v2926, %v2930
        %v2935 = vand.u32 2147483647, %v2614
        %vm2936 = vcmp.eq.f32.partialorder %v2935, 8.507059e+37
        %v2937 = vand.u32 %v2614, 2147483648
        %v2938 = vor.u32 1.1754944e-38, %v2937
        %v2939 = vsel %vm2936, %v2938, %v2934
        %v2940 = vmul.f32 1.0, %v2939
        %v2941 = vrcp.pop %v2615
        %v2942 = vmul.f32 %v2615, %v2941
        %v2943 = vsub.f32 1.0, %v2942
        %v2944 = vmul.f32 %v2941, %v2943
        %v2945 = vadd.f32 %v2941, %v2944
        %vm2946 = vweird.f32 %v2615
        %vm2947 = vweird.f32 %v2941
        %vm2948 = vmor %vm2946, %vm2947
        %v2949 = vsel %vm2948, %v2941, %v2945
        %v2950 = vand.u32 2147483647, %v2615
        %vm2951 = vcmp.eq.f32.partialorder %v2950, 8.507059e+37
        %v2952 = vand.u32 %v2615, 2147483648
        %v2953 = vor.u32 1.1754944e-38, %v2952
        %v2954 = vsel %vm2951, %v2953, %v2949
        %v2955 = vmul.f32 1.0, %v2954
        %v2956 = vrcp.pop %v2616
        %v2957 = vmul.f32 %v2616, %v2956
        %v2958 = vsub.f32 1.0, %v2957
        %v2959 = vmul.f32 %v2956, %v2958
        %v2960 = vadd.f32 %v2956, %v2959
        %vm2961 = vweird.f32 %v2616
        %vm2962 = vweird.f32 %v2956
        %vm2963 = vmor %vm2961, %vm2962
        %v2964 = vsel %vm2963, %v2956, %v2960
        %v2965 = vand.u32 2147483647, %v2616
        %vm2966 = vcmp.eq.f32.partialorder %v2965, 8.507059e+37
        %v2967 = vand.u32 %v2616, 2147483648
        %v2968 = vor.u32 1.1754944e-38, %v2967
        %v2969 = vsel %vm2966, %v2968, %v2964
        %v2970 = vmul.f32 1.0, %v2969
        %v2971 = vrcp.pop %v2617
        %v2972 = vmul.f32 %v2617, %v2971
        %v2973 = vsub.f32 1.0, %v2972
        %v2974 = vmul.f32 %v2971, %v2973
        %v2975 = vadd.f32 %v2971, %v2974
        %vm2976 = vweird.f32 %v2617
        %vm2977 = vweird.f32 %v2971
        %vm2978 = vmor %vm2976, %vm2977
        %v2979 = vsel %vm2978, %v2971, %v2975
        %v2980 = vand.u32 2147483647, %v2617
        %vm2981 = vcmp.eq.f32.partialorder %v2980, 8.507059e+37
        %v2982 = vand.u32 %v2617, 2147483648
        %v2983 = vor.u32 1.1754944e-38, %v2982
        %v2984 = vsel %vm2981, %v2983, %v2979
        %v2985 = vmul.f32 1.0, %v2984
        %v2986 = vrcp.pop %v2618
        %v2987 = vmul.f32 %v2618, %v2986
        %v2988 = vsub.f32 1.0, %v2987
        %v2989 = vmul.f32 %v2986, %v2988
        %v2990 = vadd.f32 %v2986, %v2989
        %vm2991 = vweird.f32 %v2618
        %vm2992 = vweird.f32 %v2986
        %vm2993 = vmor %vm2991, %vm2992
        %v2994 = vsel %vm2993, %v2986, %v2990
        %v2995 = vand.u32 2147483647, %v2618
        %vm2996 = vcmp.eq.f32.partialorder %v2995, 8.507059e+37
        %v2997 = vand.u32 %v2618, 2147483648
        %v2998 = vor.u32 1.1754944e-38, %v2997
        %v2999 = vsel %vm2996, %v2998, %v2994
        %v3000 = vmul.f32 1.0, %v2999
        %v3001 = vrcp.pop %v2619
        %v3002 = vmul.f32 %v2619, %v3001
        %v3003 = vsub.f32 1.0, %v3002
        %v3004 = vmul.f32 %v3001, %v3003
        %v3005 = vadd.f32 %v3001, %v3004
        %vm3006 = vweird.f32 %v2619
        %vm3007 = vweird.f32 %v3001
        %vm3008 = vmor %vm3006, %vm3007
        %v3009 = vsel %vm3008, %v3001, %v3005
        %v3010 = vand.u32 2147483647, %v2619
        %vm3011 = vcmp.eq.f32.partialorder %v3010, 8.507059e+37
        %v3012 = vand.u32 %v2619, 2147483648
        %v3013 = vor.u32 1.1754944e-38, %v3012
        %v3014 = vsel %vm3011, %v3013, %v3009
        %v3015 = vmul.f32 1.0, %v3014
        %v3016 = vrcp.pop %v2620
        %v3017 = vmul.f32 %v2620, %v3016
        %v3018 = vsub.f32 1.0, %v3017
        %v3019 = vmul.f32 %v3016, %v3018
        %v3020 = vadd.f32 %v3016, %v3019
        %vm3021 = vweird.f32 %v2620
        %vm3022 = vweird.f32 %v3016
        %vm3023 = vmor %vm3021, %vm3022
        %v3024 = vsel %vm3023, %v3016, %v3020
        %v3025 = vand.u32 2147483647, %v2620
        %vm3026 = vcmp.eq.f32.partialorder %v3025, 8.507059e+37
        %v3027 = vand.u32 %v2620, 2147483648
        %v3028 = vor.u32 1.1754944e-38, %v3027
        %v3029 = vsel %vm3026, %v3028, %v3024
        %v3030 = vmul.f32 1.0, %v3029
        %v3031 = vrcp.pop %v2621
        %v3032 = vmul.f32 %v2621, %v3031
        %v3033 = vsub.f32 1.0, %v3032
        %v3034 = vmul.f32 %v3031, %v3033
        %v3035 = vadd.f32 %v3031, %v3034
        %vm3036 = vweird.f32 %v2621
        %vm3037 = vweird.f32 %v3031
        %vm3038 = vmor %vm3036, %vm3037
        %v3039 = vsel %vm3038, %v3031, %v3035
        %v3040 = vand.u32 2147483647, %v2621
        %vm3041 = vcmp.eq.f32.partialorder %v3040, 8.507059e+37
        %v3042 = vand.u32 %v2621, 2147483648
        %v3043 = vor.u32 1.1754944e-38, %v3042
        %v3044 = vsel %vm3041, %v3043, %v3039
        %v3045 = vmul.f32 1.0, %v3044
        %v3046 = vrcp.pop %v2622
        %v3047 = vmul.f32 %v2622, %v3046
        %v3048 = vsub.f32 1.0, %v3047
        %v3049 = vmul.f32 %v3046, %v3048
        %v3050 = vadd.f32 %v3046, %v3049
        %vm3051 = vweird.f32 %v2622
        %vm3052 = vweird.f32 %v3046
        %vm3053 = vmor %vm3051, %vm3052
        %v3054 = vsel %vm3053, %v3046, %v3050
        %v3055 = vand.u32 2147483647, %v2622
        %vm3056 = vcmp.eq.f32.partialorder %v3055, 8.507059e+37
        %v3057 = vand.u32 %v2622, 2147483648
        %v3058 = vor.u32 1.1754944e-38, %v3057
        %v3059 = vsel %vm3056, %v3058, %v3054
        %v3060 = vmul.f32 1.0, %v3059
        %v3061 = vrcp.pop %v2623
        %v3062 = vmul.f32 %v2623, %v3061
        %v3063 = vsub.f32 1.0, %v3062
        %v3064 = vmul.f32 %v3061, %v3063
        %v3065 = vadd.f32 %v3061, %v3064
        %vm3066 = vweird.f32 %v2623
        %vm3067 = vweird.f32 %v3061
        %vm3068 = vmor %vm3066, %vm3067
        %v3069 = vsel %vm3068, %v3061, %v3065
        %v3070 = vand.u32 2147483647, %v2623
        %vm3071 = vcmp.eq.f32.partialorder %v3070, 8.507059e+37
        %v3072 = vand.u32 %v2623, 2147483648
        %v3073 = vor.u32 1.1754944e-38, %v3072
        %v3074 = vsel %vm3071, %v3073, %v3069
        %v3075 = vmul.f32 1.0, %v3074
        %v3076 = vrcp.pop %v2624
        %v3077 = vmul.f32 %v2624, %v3076
        %v3078 = vsub.f32 1.0, %v3077
        %v3079 = vmul.f32 %v3076, %v3078
        %v3080 = vadd.f32 %v3076, %v3079
        %vm3081 = vweird.f32 %v2624
        %vm3082 = vweird.f32 %v3076
        %vm3083 = vmor %vm3081, %vm3082
        %v3084 = vsel %vm3083, %v3076, %v3080
        %v3085 = vand.u32 2147483647, %v2624
        %vm3086 = vcmp.eq.f32.partialorder %v3085, 8.507059e+37
        %v3087 = vand.u32 %v2624, 2147483648
        %v3088 = vor.u32 1.1754944e-38, %v3087
        %v3089 = vsel %vm3086, %v3088, %v3084
        %v3090 = vmul.f32 1.0, %v3089
        %v3091 = vrcp.pop %v2625
        %v3092 = vmul.f32 %v2625, %v3091
        %v3093 = vsub.f32 1.0, %v3092
        %v3094 = vmul.f32 %v3091, %v3093
        %v3095 = vadd.f32 %v3091, %v3094
        %vm3096 = vweird.f32 %v2625
        %vm3097 = vweird.f32 %v3091
        %vm3098 = vmor %vm3096, %vm3097
        %v3099 = vsel %vm3098, %v3091, %v3095
        %v3100 = vand.u32 2147483647, %v2625
        %vm3101 = vcmp.eq.f32.partialorder %v3100, 8.507059e+37
        %v3102 = vand.u32 %v2625, 2147483648
        %v3103 = vor.u32 1.1754944e-38, %v3102
        %v3104 = vsel %vm3101, %v3103, %v3099
        %v3105 = vmul.f32 1.0, %v3104
        %v3106 = vmul.f32 %v2466, %v2640
        %v3107 = vmul.f32 %v2467, %v2655
        %v3108 = vmul.f32 %v2468, %v2670
        %v3109 = vmul.f32 %v2469, %v2685
        %v3110 = vmul.f32 %v2470, %v2700
        %v3111 = vmul.f32 %v2471, %v2715
        %v3112 = vmul.f32 %v2472, %v2730
        %v3113 = vmul.f32 %v2473, %v2745
        %v3114 = vmul.f32 %v2474, %v2760
        %v3115 = vmul.f32 %v2475, %v2775
        %v3116 = vmul.f32 %v2476, %v2790
        %v3117 = vmul.f32 %v2477, %v2805
        %v3118 = vmul.f32 %v2478, %v2820
        %v3119 = vmul.f32 %v2479, %v2835
        %v3120 = vmul.f32 %v2480, %v2850
        %v3121 = vmul.f32 %v2481, %v2865
        %v3122 = vmul.f32 %v2482, %v2880
        %v3123 = vmul.f32 %v2483, %v2895
        %v3124 = vmul.f32 %v2484, %v2910
        %v3125 = vmul.f32 %v2485, %v2925
        %v3126 = vmul.f32 %v2486, %v2940
        %v3127 = vmul.f32 %v2487, %v2955
        %v3128 = vmul.f32 %v2488, %v2970
        %v3129 = vmul.f32 %v2489, %v2985
        %v3130 = vmul.f32 %v2490, %v3000
        %v3131 = vmul.f32 %v2491, %v3015
        %v3132 = vmul.f32 %v2492, %v3030
        %v3133 = vmul.f32 %v2493, %v3045
        %v3134 = vmul.f32 %v2494, %v3060
        %v3135 = vmul.f32 %v2495, %v3075
        %v3136 = vmul.f32 %v2496, %v3090
        %v3137 = vmul.f32 %v2497, %v3105
        %3138 = vst [vmem:[%s369] sm:$0xff] %v3106
        %3139 = vst [vmem:[%s369 + $0x8] sm:$0xff] %v3107
        %3140 = vst [vmem:[%s369 + $0x10] sm:$0xff] %v3108
        %3141 = vst [vmem:[%s369 + $0x18] sm:$0xff] %v3109
        %3142 = vst [vmem:[%s369 + $0x20] sm:$0xff] %v3110
        %3143 = vst [vmem:[%s369 + $0x28] sm:$0xff] %v3111
        %3144 = vst [vmem:[%s369 + $0x30] sm:$0xff] %v3112
        %3145 = vst [vmem:[%s369 + $0x38] sm:$0xff] %v3113
        %3146 = vst [vmem:[%s369 + $0x40] sm:$0xff] %v3114
        %3147 = vst [vmem:[%s369 + $0x48] sm:$0xff] %v3115
        %3148 = vst [vmem:[%s369 + $0x50] sm:$0xff] %v3116
        %3149 = vst [vmem:[%s369 + $0x58] sm:$0xff] %v3117
        %3150 = vst [vmem:[%s369 + $0x60] sm:$0xff] %v3118
        %3151 = vst [vmem:[%s369 + $0x68] sm:$0xff] %v3119
        %3152 = vst [vmem:[%s369 + $0x70] sm:$0xff] %v3120
        %3153 = vst [vmem:[%s369 + $0x78] sm:$0xff] %v3121
        %3154 = vst [vmem:[%s369 + $0x80] sm:$0xff] %v3122
        %3155 = vst [vmem:[%s369 + $0x88] sm:$0xff] %v3123
        %3156 = vst [vmem:[%s369 + $0x90] sm:$0xff] %v3124
        %3157 = vst [vmem:[%s369 + $0x98] sm:$0xff] %v3125
        %3158 = vst [vmem:[%s369 + $0xa0] sm:$0xff] %v3126
        %3159 = vst [vmem:[%s369 + $0xa8] sm:$0xff] %v3127
        %3160 = vst [vmem:[%s369 + $0xb0] sm:$0xff] %v3128
        %3161 = vst [vmem:[%s369 + $0xb8] sm:$0xff] %v3129
        %3162 = vst [vmem:[%s369 + $0xc0] sm:$0xff] %v3130
        %3163 = vst [vmem:[%s369 + $0xc8] sm:$0xff] %v3131
        %3164 = vst [vmem:[%s369 + $0xd0] sm:$0xff] %v3132
        %3165 = vst [vmem:[%s369 + $0xd8] sm:$0xff] %v3133
        %3166 = vst [vmem:[%s369 + $0xe0] sm:$0xff] %v3134
        %3167 = vst [vmem:[%s369 + $0xe8] sm:$0xff] %v3135
        %3168 = vst [vmem:[%s369 + $0xf0] sm:$0xff] %v3136
        %3169 = vst [vmem:[%s369 + $0xf8] sm:$0xff] %v3137
        %s3170 = sand.u32 %s229, 1
        %s3171 = scalar_lea.sflag [#allocation3], %s3170
        %s3172 = sand.u32 %s229, 1
        %s3173 = smul.addr %s3172, 256
        %s3174 = scalar_lea.vmem [#allocation2], %s3173
        // Predicated region
        $region49: #{tpu_custom_call.1} parent=47 // pred_check
          %p3175 = pneg %p239
        $region50: #{tpu_custom_call.1} parent=47 // pred_check_branch
          %3177 = sbr.rel (%p3175) target = $region52
        $region51: #{tpu_custom_call.1} parent=47 // pred_region
          %3179 = vsyncadd %s3171, 0
          %s3180 = smul.addr %s25, 32
          %s3181 = sadd.s32 %s26, %s3180
          %s3182 = smul.addr %s3181, 8
          %s3183 = scalar_lea.hbm %s7, %s3182
          %s3184 = sshll.u32 %s3174, 4
          %s3185 = int_to_ptr.vmem [resolvable:$true] %s3184
          %s3186 = sshll.u32 %s3183, 4
          %s3187 = int_to_ptr.hbm [resolvable:$true] %s3186
          %3192 = dma.vmem_to_hbm [thread:$0]  %s3185, 4096, %s3187, %s3171, 128, 128, 8
        $region52: #{tpu_custom_call.1} parent=47 // pred_fallthru
          _
      $region48: #{tpu_custom_call.1} parent=5 // pred_fallthru
        _
      %p3193 = scmp.le.s32.totalorder 2, %s16
      // Predicated region
      $region53: #{tpu_custom_call.1} parent=5 // pred_check
        %p3194 = pneg %p3193
      $region54: #{tpu_custom_call.1} parent=5 // pred_check_branch
        %3196 = sbr.rel (%p3194) target = $region56
      $region55: #{tpu_custom_call.1} parent=5 // pred_region
        %s3197 = ssub.s32 %s16, 2
        // Predicated region
        $region57: #{tpu_custom_call.1} parent=55 // pred_check
          %p3198 = pneg %p245
        $region58: #{tpu_custom_call.1} parent=55 // pred_check_branch
          %3200 = sbr.rel (%p3198) target = $region60
        $region59: #{tpu_custom_call.1} parent=55 // pred_region
          %s3201 = sand.u32 %s230, 1
          %s3202 = scalar_lea.sflag [#allocation3], %s3201
          %s3203 = sand.u32 %s230, 1
          %s3204 = smul.addr %s3203, 256
          %s3205 = scalar_lea.vmem [#allocation2], %s3204
          %3207 = dma.done %s3202, 4096
        $region60: #{tpu_custom_call.1} parent=55 // pred_fallthru
          _
      $region56: #{tpu_custom_call.1} parent=5 // pred_fallthru
        _
    $region6: #{tpu_custom_call.1} parent=1 // loop_footer
      %s20 = sadd.s32 1, %s16
    $region7: #{tpu_custom_call.1} parent=1 // loop_footer_branch
      %15 = sbr.rel target = $region3
    $region8: #{tpu_custom_call.1} parent=1 // loop_exit
      _
    %3208 = vsyncpa [#allocation3], 1
    %s3209 = scalar_lea.sflag [#allocation3], 1
    %3210 = vsyncpa %s3209, 1

</llo_original>
